<compile_context>
chip_gen: v7x
topology: tpu7x:2x2x1
jax: 0.10.0
libtpu: 0.0.40
codegen_flags: <defaults>
</compile_context>

<pallas_src>
import jax
import jax.numpy as jnp
from jax.experimental import pallas as pl
from jax.experimental.pallas import tpu as pltpu

EPS = 1e-3  # matches BatchNorm2d(eps=0.001)


# --------------------------------------------------------------------------
# Kernel 1: conv (9 accumulated tap-matmuls) + per-tile channel sum / sumsq.
# --------------------------------------------------------------------------
def _conv_stats_kernel(xp00_ref, xp01_ref, xp10_ref, xp11_ref, w_ref,
                       conv_ref, sum_ref, sq_ref):
    # conv_ref block: (1, TOH, OW, Cout_p); phase blocks: (1, Hph, Wph, Cin)
    _, toh, ow, cout = conv_ref.shape
    cin = xp00_ref.shape[-1]
    phase = ((xp00_ref, xp01_ref), (xp10_ref, xp11_ref))

    # First output row of this tile.
    oh0 = pl.multiple_of(pl.program_id(1) * toh, toh)

    acc = jnp.zeros((toh * ow, cout), jnp.float32)
    for kh in range(3):
        for kw in range(3):
            xref = phase[kh % 2][kw % 2]
            # Contiguous window: rows [oh0 + kh//2, +TOH), cols [kw//2, +OW).
            win = xref[0, pl.ds(oh0 + kh // 2, toh), kw // 2:kw // 2 + ow, :]
            acc = acc + jnp.dot(win.reshape(toh * ow, cin),
                                w_ref[kh * 3 + kw],
                                preferred_element_type=jnp.float32)

    conv_ref[...] = acc.reshape(1, toh, ow, cout)
    sum_ref[...] = jnp.sum(acc, axis=0, keepdims=True).reshape(1, 1, 1, cout)
    sq_ref[...] = jnp.sum(acc * acc, axis=0, keepdims=True).reshape(1, 1, 1, cout)


# --------------------------------------------------------------------------
# Kernel 2: apply batchnorm affine with precomputed scale/shift.
# --------------------------------------------------------------------------
def _bn_apply_kernel(conv_ref, scale_ref, shift_ref, y_ref):
    y_ref[...] = conv_ref[...] * scale_ref[...] + shift_ref[...]


def _pick_row_tile(oh: int, max_rows: int = 8) -> int:
    """Largest divisor of `oh` that is <= max_rows, preferring >=2 row tiles
    so the row-tile grid axis can be split across TensorCores (v7x)."""
    cands = [d for d in range(1, oh + 1) if oh % d == 0 and d <= max_rows]
    multi = [d for d in cands if oh // d >= 2]
    return max(multi) if multi else max(cands)


def conv2d_batchnorm(x_nhwc, w_hwio, gamma, beta, *, stride=(2, 2), eps=EPS):
    """Conv2d(3x3, stride 2, VALID, no bias) + BatchNorm2d (batch stats) forward.

    x_nhwc : (N, H, W, Cin) float32
    w_hwio : (3, 3, Cin, Cout)
    gamma, beta : (Cout,)
    returns (N, OH, OW, Cout) float32
    """
    n, h, w_in, cin = x_nhwc.shape
    kh, kw, _, cout = w_hwio.shape
    assert (kh, kw) == (3, 3) and tuple(stride) == (2, 2)
    oh = (h - kh) // 2 + 1
    ow = (w_in - kw) // 2 + 1

    cout_p = ((cout + 127) // 128) * 128          # lane-dense output channels
    toh = _pick_row_tile(oh)                      # output rows per tile
    t = oh // toh
    hph, wph = oh + 1, ow + 1                     # per-phase padded extents

    # ---- glue: stride-2 phase decomposition (1x data; replaces im2col) ----
    xb = x_nhwc.astype(jnp.bfloat16)
    xpad = jnp.pad(xb, ((0, 0), (0, 2 * hph - h), (0, 2 * wph - w_in), (0, 0)))
    phases = [xpad[:, p::2, q::2, :] for p in (0, 1) for q in (0, 1)]

    wmat = w_hwio.reshape(kh * kw, cin, cout)
    if cout_p != cout:
        wmat = jnp.pad(wmat, ((0, 0), (0, 0), (0, cout_p - cout)))
    wmat = wmat.astype(jnp.bfloat16)

    phase_spec = pl.BlockSpec((1, hph, wph, cin), lambda ni, ti: (ni, 0, 0, 0))

    # ---- pass 1: conv tiles + per-tile channel sum / sumsq ----
    conv_full, sums, sqs = pl.pallas_call(
        _conv_stats_kernel,
        out_shape=(
            jax.ShapeDtypeStruct((n, oh, ow, cout_p), jnp.float32),
            jax.ShapeDtypeStruct((n, t, 1, cout_p), jnp.float32),
            jax.ShapeDtypeStruct((n, t, 1, cout_p), jnp.float32),
        ),
        grid_spec=pltpu.PrefetchScalarGridSpec(
            num_scalar_prefetch=0,
            grid=(n, t),
            in_specs=[
                phase_spec, phase_spec, phase_spec, phase_spec,
                pl.BlockSpec((kh * kw, cin, cout_p), lambda ni, ti: (0, 0, 0)),
            ],
            out_specs=(
                pl.BlockSpec((1, toh, ow, cout_p), lambda ni, ti: (ni, ti, 0, 0)),
                pl.BlockSpec((1, 1, 1, cout_p), lambda ni, ti: (ni, ti, 0, 0)),
                pl.BlockSpec((1, 1, 1, cout_p), lambda ni, ti: (ni, ti, 0, 0)),
            ),
        ),
        compiler_params=pltpu.CompilerParams(
            dimension_semantics=("parallel", "parallel")),
        cost_estimate=pl.CostEstimate(
            flops=2 * n * oh * ow * kh * kw * cin * cout_p,
            transcendentals=0,
            bytes_accessed=(4 * n * hph * wph * cin * 2
                            + kh * kw * cin * cout_p * 2
                            + n * oh * ow * cout_p * 4
                            + 2 * n * t * cout_p * 4),
        ),
    )(*phases, wmat)

    # ---- tiny (Cout,) combine: exact batch stats from per-tile sum/sumsq ----
    m = n * oh * ow
    total = jnp.sum(sums, axis=(0, 1, 2))
    total_sq = jnp.sum(sqs, axis=(0, 1, 2))
    mean = total / m
    var = total_sq / m - mean * mean              # biased variance (BN training)
    inv = jax.lax.rsqrt(var + eps)
    gamma_p = jnp.pad(gamma.astype(jnp.float32), (0, cout_p - cout))
    beta_p = jnp.pad(beta.astype(jnp.float32), (0, cout_p - cout))
    scale = (inv * gamma_p).reshape(1, 1, 1, cout_p)
    shift = (beta_p - mean * inv * gamma_p).reshape(1, 1, 1, cout_p)

    # ---- pass 2: apply y = conv * scale + shift over the same tile grid ----
    y = pl.pallas_call(
        _bn_apply_kernel,
        out_shape=jax.ShapeDtypeStruct((n, oh, ow, cout_p), jnp.float32),
        grid_spec=pltpu.PrefetchScalarGridSpec(
            num_scalar_prefetch=0,
            grid=(n, t),
            in_specs=[
                pl.BlockSpec((1, toh, ow, cout_p), lambda ni, ti: (ni, ti, 0, 0)),
                pl.BlockSpec((1, 1, 1, cout_p), lambda ni, ti: (0, 0, 0, 0)),
                pl.BlockSpec((1, 1, 1, cout_p), lambda ni, ti: (0, 0, 0, 0)),
            ],
            out_specs=pl.BlockSpec((1, toh, ow, cout_p),
                                   lambda ni, ti: (ni, ti, 0, 0)),
        ),
        compiler_params=pltpu.CompilerParams(
            dimension_semantics=("parallel", "parallel")),
        cost_estimate=pl.CostEstimate(
            flops=2 * n * oh * ow * cout_p,
            transcendentals=0,
            bytes_accessed=2 * n * oh * ow * cout_p * 4 + 2 * cout_p * 4,
        ),
    )(conv_full, scale, shift)

    return y[..., :cout]


def _reference(x_nhwc, w_hwio, gamma, beta, stride=(2, 2), eps=EPS):
    """Pure-JAX reference: conv (bf16 operands, f32 accum) + training-mode BN."""
    y = jax.lax.conv_general_dilated(
        x_nhwc.astype(jnp.bfloat16), w_hwio.astype(jnp.bfloat16),
        window_strides=stride, padding="VALID",
        dimension_numbers=("NHWC", "HWIO", "NHWC"),
        preferred_element_type=jnp.float32)
    mean = jnp.mean(y, axis=(0, 1, 2), keepdims=True)
    var = jnp.mean((y - mean) ** 2, axis=(0, 1, 2), keepdims=True)
    return (y - mean) * jax.lax.rsqrt(var + eps) * gamma + beta


if __name__ == "__main__":
    # Small shapes consistent with the module's structure
    # (original: N=1, Cin=288, H=W=25, Cout=384, k=3, stride=2 -> 12x12 output).
    # Cout kept a multiple of 128 (lane-dense); 17x17 -> 8x8 output -> 2 row tiles.
    N, CIN, H, W = 2, 32, 17, 17
    COUT, KH, KW = 128, 3, 3

    key = jax.random.PRNGKey(0)
    kx, kw_, kg, kb = jax.random.split(key, 4)

    x = jax.random.normal(kx, (N, H, W, CIN), dtype=jnp.float32)
    w = jax.random.normal(kw_, (KH, KW, CIN, COUT), dtype=jnp.float32) * 0.05
    gamma = 1.0 + 0.1 * jax.random.normal(kg, (COUT,), dtype=jnp.float32)
    beta = 0.1 * jax.random.normal(kb, (COUT,), dtype=jnp.float32)

    out = conv2d_batchnorm(x, w, gamma, beta)
    out = jax.block_until_ready(out)

    ref = _reference(x, w, gamma, beta)
    assert out.shape == (N, (H - KH) // 2 + 1, (W - KW) // 2 + 1, COUT), out.shape
    max_err = float(jnp.max(jnp.abs(out - ref)))
    assert jnp.allclose(out, ref, atol=1e-2, rtol=1e-2), max_err

    print("KERNEL_OK")
</pallas_src>

<mosaic_0001>
module attributes {stable_mosaic.version = 11 : i64} {
  func.func @_conv_stats_kernel(%arg0: i32, %arg1: i32, %arg2: memref<1x9x9x32xbf16, #tpu.memory_space<vmem>>, %arg3: memref<1x9x9x32xbf16, #tpu.memory_space<vmem>>, %arg4: memref<1x9x9x32xbf16, #tpu.memory_space<vmem>>, %arg5: memref<1x9x9x32xbf16, #tpu.memory_space<vmem>>, %arg6: memref<9x32x128xbf16, #tpu.memory_space<vmem>>, %arg7: memref<1x4x8x128xf32, #tpu.memory_space<vmem>>, %arg8: memref<1x1x1x128xf32, #tpu.memory_space<vmem>>, %arg9: memref<1x1x1x128xf32, #tpu.memory_space<vmem>>) attributes {dimension_semantics = [#tpu.dimension_semantics<parallel>, #tpu.dimension_semantics<parallel>], iteration_bounds = array<i64: 2, 2>, scalar_prefetch = 0 : i64, scratch_operands = 0 : i64, tpu.core_type = #tpu.core_type<tc>, window_params = [{transform_indices = @transform_0, window_bounds = array<i64: 1, 9, 9, 32>}, {transform_indices = @transform_1, window_bounds = array<i64: 1, 9, 9, 32>}, {transform_indices = @transform_2, window_bounds = array<i64: 1, 9, 9, 32>}, {transform_indices = @transform_3, window_bounds = array<i64: 1, 9, 9, 32>}, {pipeline_mode = #tpu.pipeline_mode<synchronous>, transform_indices = @transform_4, window_bounds = array<i64: 9, 32, 128>}, {transform_indices = @transform_5, window_bounds = array<i64: 1, 4, 8, 128>}, {transform_indices = @transform_6, window_bounds = array<i64: 1, 1, 1, 128>}, {transform_indices = @transform_7, window_bounds = array<i64: 1, 1, 1, 128>}]} {
    %c4_i32 = arith.constant 4 : i32
    %0 = arith.muli %arg1, %c4_i32 : i32
    %1 = tpu.assume_multiple %0, 4 : i32
    %cst = arith.constant 0.000000e+00 : f32
    %2 = vector.broadcast %cst : f32 to vector<32x128xf32>
    %c0_i32 = arith.constant 0 : i32
    %3 = arith.addi %1, %c0_i32 : i32
    %c0 = arith.constant 0 : index
    %4 = arith.index_cast %3 : i32 to index
    %c0_0 = arith.constant 0 : index
    %c0_1 = arith.constant 0 : index
    %5 = vector.load %arg2[%c0, %4, %c0_0, %c0_1] : memref<1x9x9x32xbf16, #tpu.memory_space<vmem>>, vector<1x4x8x32xbf16>
    %6 = vector.shape_cast %5 : vector<1x4x8x32xbf16> to vector<4x8x32xbf16>
    %7 = vector.shape_cast %6 : vector<4x8x32xbf16> to vector<32x32xbf16>
    %c0_2 = arith.constant 0 : index
    %c0_3 = arith.constant 0 : index
    %c0_4 = arith.constant 0 : index
    %8 = vector.load %arg6[%c0_2, %c0_3, %c0_4] : memref<9x32x128xbf16, #tpu.memory_space<vmem>>, vector<1x32x128xbf16>
    %9 = vector.shape_cast %8 : vector<1x32x128xbf16> to vector<32x128xbf16>
    %cst_5 = arith.constant dense<0.000000e+00> : vector<32x128xf32>
    %10 = tpu.matmul %7, %9, %cst_5 {dimension_numbers = #tpu.dot_dimension_numbers<[1], [0], [0], [1], [0, 0, 1, 1], [], []>} : vector<32x32xbf16>, vector<32x128xbf16>, vector<32x128xf32> -> vector<32x128xf32>
    %11 = arith.addf %2, %10 : vector<32x128xf32>
    %c0_i32_6 = arith.constant 0 : i32
    %12 = arith.addi %1, %c0_i32_6 : i32
    %c0_7 = arith.constant 0 : index
    %13 = arith.index_cast %12 : i32 to index
    %c0_8 = arith.constant 0 : index
    %c0_9 = arith.constant 0 : index
    %14 = vector.load %arg3[%c0_7, %13, %c0_8, %c0_9] : memref<1x9x9x32xbf16, #tpu.memory_space<vmem>>, vector<1x4x8x32xbf16>
    %15 = vector.shape_cast %14 : vector<1x4x8x32xbf16> to vector<4x8x32xbf16>
    %16 = vector.shape_cast %15 : vector<4x8x32xbf16> to vector<32x32xbf16>
    %c1 = arith.constant 1 : index
    %c0_10 = arith.constant 0 : index
    %c0_11 = arith.constant 0 : index
    %17 = vector.load %arg6[%c1, %c0_10, %c0_11] : memref<9x32x128xbf16, #tpu.memory_space<vmem>>, vector<1x32x128xbf16>
    %18 = vector.shape_cast %17 : vector<1x32x128xbf16> to vector<32x128xbf16>
    %cst_12 = arith.constant dense<0.000000e+00> : vector<32x128xf32>
    %19 = tpu.matmul %16, %18, %cst_12 {dimension_numbers = #tpu.dot_dimension_numbers<[1], [0], [0], [1], [0, 0, 1, 1], [], []>} : vector<32x32xbf16>, vector<32x128xbf16>, vector<32x128xf32> -> vector<32x128xf32>
    %20 = arith.addf %11, %19 : vector<32x128xf32>
    %c0_i32_13 = arith.constant 0 : i32
    %21 = arith.addi %1, %c0_i32_13 : i32
    %c0_14 = arith.constant 0 : index
    %22 = arith.index_cast %21 : i32 to index
    %c1_15 = arith.constant 1 : index
    %c0_16 = arith.constant 0 : index
    %23 = vector.load %arg2[%c0_14, %22, %c1_15, %c0_16] : memref<1x9x9x32xbf16, #tpu.memory_space<vmem>>, vector<1x4x8x32xbf16>
    %24 = vector.shape_cast %23 : vector<1x4x8x32xbf16> to vector<4x8x32xbf16>
    %25 = vector.shape_cast %24 : vector<4x8x32xbf16> to vector<32x32xbf16>
    %c2 = arith.constant 2 : index
    %c0_17 = arith.constant 0 : index
    %c0_18 = arith.constant 0 : index
    %26 = vector.load %arg6[%c2, %c0_17, %c0_18] : memref<9x32x128xbf16, #tpu.memory_space<vmem>>, vector<1x32x128xbf16>
    %27 = vector.shape_cast %26 : vector<1x32x128xbf16> to vector<32x128xbf16>
    %cst_19 = arith.constant dense<0.000000e+00> : vector<32x128xf32>
    %28 = tpu.matmul %25, %27, %cst_19 {dimension_numbers = #tpu.dot_dimension_numbers<[1], [0], [0], [1], [0, 0, 1, 1], [], []>} : vector<32x32xbf16>, vector<32x128xbf16>, vector<32x128xf32> -> vector<32x128xf32>
    %29 = arith.addf %20, %28 : vector<32x128xf32>
    %c0_i32_20 = arith.constant 0 : i32
    %30 = arith.addi %1, %c0_i32_20 : i32
    %c0_21 = arith.constant 0 : index
    %31 = arith.index_cast %30 : i32 to index
    %c0_22 = arith.constant 0 : index
    %c0_23 = arith.constant 0 : index
    %32 = vector.load %arg4[%c0_21, %31, %c0_22, %c0_23] : memref<1x9x9x32xbf16, #tpu.memory_space<vmem>>, vector<1x4x8x32xbf16>
    %33 = vector.shape_cast %32 : vector<1x4x8x32xbf16> to vector<4x8x32xbf16>
    %34 = vector.shape_cast %33 : vector<4x8x32xbf16> to vector<32x32xbf16>
    %c3 = arith.constant 3 : index
    %c0_24 = arith.constant 0 : index
    %c0_25 = arith.constant 0 : index
    %35 = vector.load %arg6[%c3, %c0_24, %c0_25] : memref<9x32x128xbf16, #tpu.memory_space<vmem>>, vector<1x32x128xbf16>
    %36 = vector.shape_cast %35 : vector<1x32x128xbf16> to vector<32x128xbf16>
    %cst_26 = arith.constant dense<0.000000e+00> : vector<32x128xf32>
    %37 = tpu.matmul %34, %36, %cst_26 {dimension_numbers = #tpu.dot_dimension_numbers<[1], [0], [0], [1], [0, 0, 1, 1], [], []>} : vector<32x32xbf16>, vector<32x128xbf16>, vector<32x128xf32> -> vector<32x128xf32>
    %38 = arith.addf %29, %37 : vector<32x128xf32>
    %c0_i32_27 = arith.constant 0 : i32
    %39 = arith.addi %1, %c0_i32_27 : i32
    %c0_28 = arith.constant 0 : index
    %40 = arith.index_cast %39 : i32 to index
    %c0_29 = arith.constant 0 : index
    %c0_30 = arith.constant 0 : index
    %41 = vector.load %arg5[%c0_28, %40, %c0_29, %c0_30] : memref<1x9x9x32xbf16, #tpu.memory_space<vmem>>, vector<1x4x8x32xbf16>
    %42 = vector.shape_cast %41 : vector<1x4x8x32xbf16> to vector<4x8x32xbf16>
    %43 = vector.shape_cast %42 : vector<4x8x32xbf16> to vector<32x32xbf16>
    %c4 = arith.constant 4 : index
    %c0_31 = arith.constant 0 : index
    %c0_32 = arith.constant 0 : index
    %44 = vector.load %arg6[%c4, %c0_31, %c0_32] : memref<9x32x128xbf16, #tpu.memory_space<vmem>>, vector<1x32x128xbf16>
    %45 = vector.shape_cast %44 : vector<1x32x128xbf16> to vector<32x128xbf16>
    %cst_33 = arith.constant dense<0.000000e+00> : vector<32x128xf32>
    %46 = tpu.matmul %43, %45, %cst_33 {dimension_numbers = #tpu.dot_dimension_numbers<[1], [0], [0], [1], [0, 0, 1, 1], [], []>} : vector<32x32xbf16>, vector<32x128xbf16>, vector<32x128xf32> -> vector<32x128xf32>
    %47 = arith.addf %38, %46 : vector<32x128xf32>
    %c0_i32_34 = arith.constant 0 : i32
    %48 = arith.addi %1, %c0_i32_34 : i32
    %c0_35 = arith.constant 0 : index
    %49 = arith.index_cast %48 : i32 to index
    %c1_36 = arith.constant 1 : index
    %c0_37 = arith.constant 0 : index
    %50 = vector.load %arg4[%c0_35, %49, %c1_36, %c0_37] : memref<1x9x9x32xbf16, #tpu.memory_space<vmem>>, vector<1x4x8x32xbf16>
    %51 = vector.shape_cast %50 : vector<1x4x8x32xbf16> to vector<4x8x32xbf16>
    %52 = vector.shape_cast %51 : vector<4x8x32xbf16> to vector<32x32xbf16>
    %c5 = arith.constant 5 : index
    %c0_38 = arith.constant 0 : index
    %c0_39 = arith.constant 0 : index
    %53 = vector.load %arg6[%c5, %c0_38, %c0_39] : memref<9x32x128xbf16, #tpu.memory_space<vmem>>, vector<1x32x128xbf16>
    %54 = vector.shape_cast %53 : vector<1x32x128xbf16> to vector<32x128xbf16>
    %cst_40 = arith.constant dense<0.000000e+00> : vector<32x128xf32>
    %55 = tpu.matmul %52, %54, %cst_40 {dimension_numbers = #tpu.dot_dimension_numbers<[1], [0], [0], [1], [0, 0, 1, 1], [], []>} : vector<32x32xbf16>, vector<32x128xbf16>, vector<32x128xf32> -> vector<32x128xf32>
    %56 = arith.addf %47, %55 : vector<32x128xf32>
    %c1_i32 = arith.constant 1 : i32
    %57 = arith.addi %1, %c1_i32 : i32
    %c0_41 = arith.constant 0 : index
    %58 = arith.index_cast %57 : i32 to index
    %c0_42 = arith.constant 0 : index
    %c0_43 = arith.constant 0 : index
    %59 = vector.load %arg2[%c0_41, %58, %c0_42, %c0_43] : memref<1x9x9x32xbf16, #tpu.memory_space<vmem>>, vector<1x4x8x32xbf16>
    %60 = vector.shape_cast %59 : vector<1x4x8x32xbf16> to vector<4x8x32xbf16>
    %61 = vector.shape_cast %60 : vector<4x8x32xbf16> to vector<32x32xbf16>
    %c6 = arith.constant 6 : index
    %c0_44 = arith.constant 0 : index
    %c0_45 = arith.constant 0 : index
    %62 = vector.load %arg6[%c6, %c0_44, %c0_45] : memref<9x32x128xbf16, #tpu.memory_space<vmem>>, vector<1x32x128xbf16>
    %63 = vector.shape_cast %62 : vector<1x32x128xbf16> to vector<32x128xbf16>
    %cst_46 = arith.constant dense<0.000000e+00> : vector<32x128xf32>
    %64 = tpu.matmul %61, %63, %cst_46 {dimension_numbers = #tpu.dot_dimension_numbers<[1], [0], [0], [1], [0, 0, 1, 1], [], []>} : vector<32x32xbf16>, vector<32x128xbf16>, vector<32x128xf32> -> vector<32x128xf32>
    %65 = arith.addf %56, %64 : vector<32x128xf32>
    %c1_i32_47 = arith.constant 1 : i32
    %66 = arith.addi %1, %c1_i32_47 : i32
    %c0_48 = arith.constant 0 : index
    %67 = arith.index_cast %66 : i32 to index
    %c0_49 = arith.constant 0 : index
    %c0_50 = arith.constant 0 : index
    %68 = vector.load %arg3[%c0_48, %67, %c0_49, %c0_50] : memref<1x9x9x32xbf16, #tpu.memory_space<vmem>>, vector<1x4x8x32xbf16>
    %69 = vector.shape_cast %68 : vector<1x4x8x32xbf16> to vector<4x8x32xbf16>
    %70 = vector.shape_cast %69 : vector<4x8x32xbf16> to vector<32x32xbf16>
    %c7 = arith.constant 7 : index
    %c0_51 = arith.constant 0 : index
    %c0_52 = arith.constant 0 : index
    %71 = vector.load %arg6[%c7, %c0_51, %c0_52] : memref<9x32x128xbf16, #tpu.memory_space<vmem>>, vector<1x32x128xbf16>
    %72 = vector.shape_cast %71 : vector<1x32x128xbf16> to vector<32x128xbf16>
    %cst_53 = arith.constant dense<0.000000e+00> : vector<32x128xf32>
    %73 = tpu.matmul %70, %72, %cst_53 {dimension_numbers = #tpu.dot_dimension_numbers<[1], [0], [0], [1], [0, 0, 1, 1], [], []>} : vector<32x32xbf16>, vector<32x128xbf16>, vector<32x128xf32> -> vector<32x128xf32>
    %74 = arith.addf %65, %73 : vector<32x128xf32>
    %c1_i32_54 = arith.constant 1 : i32
    %75 = arith.addi %1, %c1_i32_54 : i32
    %c0_55 = arith.constant 0 : index
    %76 = arith.index_cast %75 : i32 to index
    %c1_56 = arith.constant 1 : index
    %c0_57 = arith.constant 0 : index
    %77 = vector.load %arg2[%c0_55, %76, %c1_56, %c0_57] : memref<1x9x9x32xbf16, #tpu.memory_space<vmem>>, vector<1x4x8x32xbf16>
    %78 = vector.shape_cast %77 : vector<1x4x8x32xbf16> to vector<4x8x32xbf16>
    %79 = vector.shape_cast %78 : vector<4x8x32xbf16> to vector<32x32xbf16>
    %c8 = arith.constant 8 : index
    %c0_58 = arith.constant 0 : index
    %c0_59 = arith.constant 0 : index
    %80 = vector.load %arg6[%c8, %c0_58, %c0_59] : memref<9x32x128xbf16, #tpu.memory_space<vmem>>, vector<1x32x128xbf16>
    %81 = vector.shape_cast %80 : vector<1x32x128xbf16> to vector<32x128xbf16>
    %cst_60 = arith.constant dense<0.000000e+00> : vector<32x128xf32>
    %82 = tpu.matmul %79, %81, %cst_60 {dimension_numbers = #tpu.dot_dimension_numbers<[1], [0], [0], [1], [0, 0, 1, 1], [], []>} : vector<32x32xbf16>, vector<32x128xbf16>, vector<32x128xf32> -> vector<32x128xf32>
    %83 = arith.addf %74, %82 : vector<32x128xf32>
    %84 = vector.shape_cast %83 : vector<32x128xf32> to vector<1x4x8x128xf32>
    %c0_61 = arith.constant 0 : index
    %c0_62 = arith.constant 0 : index
    %c0_63 = arith.constant 0 : index
    %c0_64 = arith.constant 0 : index
    %85 = vector.load %arg7[%c0_61, %c0_62, %c0_63, %c0_64] : memref<1x4x8x128xf32, #tpu.memory_space<vmem>>, vector<1x4x8x128xf32>
    tpu.vector_store %arg7[%c0_61, %c0_62, %c0_63, %c0_64], %84 {strides = array<i32>} : memref<1x4x8x128xf32, #tpu.memory_space<vmem>>, vector<1x4x8x128xf32>,
    %cst_65 = arith.constant dense<0.000000e+00> : vector<128xf32>
    %86 = vector.multi_reduction <add>, %83, %cst_65 [0] : vector<32x128xf32> to vector<128xf32>
    %87 = vector.shape_cast %86 : vector<128xf32> to vector<1x128xf32>
    %88 = vector.shape_cast %87 : vector<1x128xf32> to vector<1x1x1x128xf32>
    %c0_66 = arith.constant 0 : index
    %c0_67 = arith.constant 0 : index
    %c0_68 = arith.constant 0 : index
    %c0_69 = arith.constant 0 : index
    %89 = vector.load %arg8[%c0_66, %c0_67, %c0_68, %c0_69] : memref<1x1x1x128xf32, #tpu.memory_space<vmem>>, vector<1x1x1x128xf32>
    tpu.vector_store %arg8[%c0_66, %c0_67, %c0_68, %c0_69], %88 {strides = array<i32>} : memref<1x1x1x128xf32, #tpu.memory_space<vmem>>, vector<1x1x1x128xf32>,
    %90 = arith.mulf %83, %83 : vector<32x128xf32>
    %cst_70 = arith.constant dense<0.000000e+00> : vector<128xf32>
    %91 = vector.multi_reduction <add>, %90, %cst_70 [0] : vector<32x128xf32> to vector<128xf32>
    %92 = vector.shape_cast %91 : vector<128xf32> to vector<1x128xf32>
    %93 = vector.shape_cast %92 : vector<1x128xf32> to vector<1x1x1x128xf32>
    %c0_71 = arith.constant 0 : index
    %c0_72 = arith.constant 0 : index
    %c0_73 = arith.constant 0 : index
    %c0_74 = arith.constant 0 : index
    %94 = vector.load %arg9[%c0_71, %c0_72, %c0_73, %c0_74] : memref<1x1x1x128xf32, #tpu.memory_space<vmem>>, vector<1x1x1x128xf32>
    tpu.vector_store %arg9[%c0_71, %c0_72, %c0_73, %c0_74], %93 {strides = array<i32>} : memref<1x1x1x128xf32, #tpu.memory_space<vmem>>, vector<1x1x1x128xf32>,
    return
  }
  func.func @transform_0(%arg0: i32, %arg1: i32) -> (i32, i32, i32, i32) {
    %c0_i32 = arith.constant 0 : i32
    %c0_i32_0 = arith.constant 0 : i32
    %c0_i32_1 = arith.constant 0 : i32
    %c0_i32_2 = arith.constant 0 : i32
    return %arg0, %c0_i32, %c0_i32_0, %c0_i32_1 : i32, i32, i32, i32
  }
  func.func @transform_1(%arg0: i32, %arg1: i32) -> (i32, i32, i32, i32) {
    %c0_i32 = arith.constant 0 : i32
    %c0_i32_0 = arith.constant 0 : i32
    %c0_i32_1 = arith.constant 0 : i32
    %c0_i32_2 = arith.constant 0 : i32
    return %arg0, %c0_i32, %c0_i32_0, %c0_i32_1 : i32, i32, i32, i32
  }
  func.func @transform_2(%arg0: i32, %arg1: i32) -> (i32, i32, i32, i32) {
    %c0_i32 = arith.constant 0 : i32
    %c0_i32_0 = arith.constant 0 : i32
    %c0_i32_1 = arith.constant 0 : i32
    %c0_i32_2 = arith.constant 0 : i32
    return %arg0, %c0_i32, %c0_i32_0, %c0_i32_1 : i32, i32, i32, i32
  }
  func.func @transform_3(%arg0: i32, %arg1: i32) -> (i32, i32, i32, i32) {
    %c0_i32 = arith.constant 0 : i32
    %c0_i32_0 = arith.constant 0 : i32
    %c0_i32_1 = arith.constant 0 : i32
    %c0_i32_2 = arith.constant 0 : i32
    return %arg0, %c0_i32, %c0_i32_0, %c0_i32_1 : i32, i32, i32, i32
  }
  func.func @transform_4(%arg0: i32, %arg1: i32) -> (i32, i32, i32) {
    %c0_i32 = arith.constant 0 : i32
    %c0_i32_0 = arith.constant 0 : i32
    %c0_i32_1 = arith.constant 0 : i32
    %c0_i32_2 = arith.constant 0 : i32
    return %c0_i32, %c0_i32_0, %c0_i32_1 : i32, i32, i32
  }
  func.func @transform_5(%arg0: i32, %arg1: i32) -> (i32, i32, i32, i32) {
    %c0_i32 = arith.constant 0 : i32
    %c0_i32_0 = arith.constant 0 : i32
    %c0_i32_1 = arith.constant 0 : i32
    return %arg0, %arg1, %c0_i32, %c0_i32_0 : i32, i32, i32, i32
  }
  func.func @transform_6(%arg0: i32, %arg1: i32) -> (i32, i32, i32, i32) {
    %c0_i32 = arith.constant 0 : i32
    %c0_i32_0 = arith.constant 0 : i32
    %c0_i32_1 = arith.constant 0 : i32
    return %arg0, %arg1, %c0_i32, %c0_i32_0 : i32, i32, i32, i32
  }
  func.func @transform_7(%arg0: i32, %arg1: i32) -> (i32, i32, i32, i32) {
    %c0_i32 = arith.constant 0 : i32
    %c0_i32_0 = arith.constant 0 : i32
    %c0_i32_1 = arith.constant 0 : i32
    return %arg0, %arg1, %c0_i32, %c0_i32_0 : i32, i32, i32, i32
  }
}

</mosaic_0001>

<llo_original>
// kernel: tpu_custom_call.1
$region0: #{tpu_custom_call.1}
  #allocation0 [shape = 'u32[]', space=smem, size = 0x4, offset = 0x4, fixed_abs, tag = 'smem constant byte address 0x4 - core index']
  #allocation1 [shape = 'u32[144,128]{1,0:T(1,128)}', space=vmem, size = 0x12000, scoped, tag = 'internal scratch']
  %s0 = inlined_call_operand.vmem [shape: bf16[2,9,9,32], index: 0, kind: input, shape index: {}]
  %s1 = inlined_call_operand.vmem [shape: bf16[2,9,9,32], index: 1, kind: input, shape index: {}]
  %s2 = inlined_call_operand.vmem [shape: bf16[2,9,9,32], index: 2, kind: input, shape index: {}]
  %s3 = inlined_call_operand.vmem [shape: bf16[2,9,9,32], index: 3, kind: input, shape index: {}]
  %s4 = inlined_call_operand.vmem [shape: bf16[9,32,128], index: 4, kind: input, shape index: {}]
  %s5 = inlined_call_operand.hbm [shape: f32[2,8,8,128], index: 5, kind: output, shape index: {0}]
  %s6 = inlined_call_operand.hbm [shape: f32[2,2,1,128], index: 6, kind: output, shape index: {1}]
  %s7 = inlined_call_operand.hbm [shape: f32[2,2,1,128], index: 7, kind: output, shape index: {2}]
  %8 = xla_tuple %s5, %s6, %s7
  %s9 = sld [smem:[#allocation0]]
  $region69: #{tpu_custom_call.1} parent=0
    _
  %s11 = ssub.s32 1, %s9
  %s12 = scalar_select 0, %s11, %s9
  $region1: #{tpu_custom_call.1} parent=0
    #allocation2 [shape = 'u8[32768]{0}', space=vmem, size = 0x8000, scoped, tag = 'output window, operand 0']
    #allocation3 [shape = 's32[2]{0}', space=sflag, size = 0x8, scoped, tag = 'scoped memory for tpu_custom_call.1']
    #allocation4 [shape = 'u8[1024]{0}', space=vmem, size = 0x400, scoped, tag = 'output window, operand 1']
    #allocation5 [shape = 's32[2]{0}', space=sflag, size = 0x8, scoped, tag = 'scoped memory for tpu_custom_call.1']
    #allocation6 [shape = 'u8[1024]{0}', space=vmem, size = 0x400, scoped, tag = 'output window, operand 2']
    %13 = vsyncpa [#allocation3], 0
    %s14 = scalar_lea.sflag [#allocation3], 1
    %15 = vsyncpa %s14, 0
    %16 = vsyncpa [#allocation5], 0
    %s17 = scalar_lea.sflag [#allocation5], 1
    %18 = vsyncpa %s17, 0
    loop: start=0, step=1, limit=6
    $region2: #{tpu_custom_call.1} parent=1 // loop_pre_header
      _
    $region3: #{tpu_custom_call.1} parent=1 // loop_header
      %s20 = sphi 0, %s24
      %p21 = scmp.ge.s32.totalorder %s20, 6
      %s27 = sphi 0, %s39
      %s28 = sphi 0, %s35
      %s29 = sphi 0, %s27
      %s30 = sphi 0, %s28
      %s31 = sphi 0, %s29
      %s32 = sphi 0, %s30
      %s42 = sphi 0, %s44
      %s45 = sphi 0, %s42
      %s46 = sphi 0, %s45
      %s62 = sphi 0, %s46
      %s68 = sphi 0, %s70
      %s71 = sphi 0, %s68
      %s72 = sphi 0, %s71
      %s88 = sphi 0, %s72
      %s94 = sphi 0, %s96
      %s97 = sphi 0, %s94
      %s98 = sphi 0, %s97
      %s114 = sphi 0, %s98
      %s120 = sphi 0, %s122
      %s123 = sphi 0, %s120
      %s124 = sphi 0, %s123
      %s140 = sphi 0, %s124
      %s144 = sphi 0, %s144
      %s146 = sphi 0, %s144
      %s147 = sphi 0, %s146
      %s161 = sphi 0, %s147
      %s169 = sphi 0, %s171
      %s172 = sphi 0, %s169
      %s173 = sphi 0, %s172
      %s189 = sphi 0, %s173
      %s197 = sphi 0, %s199
      %s200 = sphi 0, %s197
      %s201 = sphi 0, %s200
      %s217 = sphi 0, %s201
      %s225 = sphi 0, %s227
      %s228 = sphi 0, %s225
      %s229 = sphi 0, %s228
      %s245 = sphi 0, %s229
    $region4: #{tpu_custom_call.1} parent=1 // loop_header_branch
      %23 = sbr.rel (%p21) target = $region8
    $region5: #{tpu_custom_call.1} parent=1 // loop_body
      %s25 = ssub.s32 %s20, 1
      %s26 = ssub.s32 %s20, 2
      %s33 = sadd.s32 1, %s28
      %p34 = scmp.ge.s32.totalorder %s33, 2
      %s35 = scalar_select %p34, 0, %s33
      %s36 = sadd.s32 1, %s27
      %s37 = scalar_select %p34, %s36, %s27
      %p38 = scmp.ge.s32.totalorder %s37, 2
      %s39 = scalar_select %p38, 0, %s37
      %s40 = ssub.s32 %s27, %s39
      %p41 = scmp.eq.s32.totalorder %s40, 0
      %s43 = sadd.s32 %s42, 1
      %s44 = scalar_select %p41, %s42, %s43
      %p47 = pneg %p41
      %p48 = scmp.eq.s32.totalorder %s20, 3
      %p49 = por %p47, %p48
      %p50 = scmp.ne.s32.totalorder %s42, %s45
      %p51 = scmp.eq.s32.totalorder %s20, 0
      %p52 = por %p50, %p51
      %p53 = scmp.ne.s32.totalorder %s42, %s45
      %p54 = scmp.eq.s32.totalorder %s25, 3
      %p55 = por %p53, %p54
      %p56 = scmp.ne.s32.totalorder %s45, %s46
      %p57 = scmp.eq.s32.totalorder %s25, 0
      %p58 = por %p56, %p57
      %p59 = scmp.ne.s32.totalorder %s45, %s46
      %p60 = scmp.eq.s32.totalorder %s26, 3
      %p61 = por %p59, %p60
      %p63 = scmp.ne.s32.totalorder %s46, %s62
      %p64 = scmp.eq.s32.totalorder %s26, 0
      %p65 = por %p63, %p64
      %s66 = ssub.s32 %s27, %s39
      %p67 = scmp.eq.s32.totalorder %s66, 0
      %s69 = sadd.s32 %s68, 1
      %s70 = scalar_select %p67, %s68, %s69
      %p73 = pneg %p67
      %p74 = scmp.eq.s32.totalorder %s20, 3
      %p75 = por %p73, %p74
      %p76 = scmp.ne.s32.totalorder %s68, %s71
      %p77 = scmp.eq.s32.totalorder %s20, 0
      %p78 = por %p76, %p77
      %p79 = scmp.ne.s32.totalorder %s68, %s71
      %p80 = scmp.eq.s32.totalorder %s25, 3
      %p81 = por %p79, %p80
      %p82 = scmp.ne.s32.totalorder %s71, %s72
      %p83 = scmp.eq.s32.totalorder %s25, 0
      %p84 = por %p82, %p83
      %p85 = scmp.ne.s32.totalorder %s71, %s72
      %p86 = scmp.eq.s32.totalorder %s26, 3
      %p87 = por %p85, %p86
      %p89 = scmp.ne.s32.totalorder %s72, %s88
      %p90 = scmp.eq.s32.totalorder %s26, 0
      %p91 = por %p89, %p90
      %s92 = ssub.s32 %s27, %s39
      %p93 = scmp.eq.s32.totalorder %s92, 0
      %s95 = sadd.s32 %s94, 1
      %s96 = scalar_select %p93, %s94, %s95
      %p99 = pneg %p93
      %p100 = scmp.eq.s32.totalorder %s20, 3
      %p101 = por %p99, %p100
      %p102 = scmp.ne.s32.totalorder %s94, %s97
      %p103 = scmp.eq.s32.totalorder %s20, 0
      %p104 = por %p102, %p103
      %p105 = scmp.ne.s32.totalorder %s94, %s97
      %p106 = scmp.eq.s32.totalorder %s25, 3
      %p107 = por %p105, %p106
      %p108 = scmp.ne.s32.totalorder %s97, %s98
      %p109 = scmp.eq.s32.totalorder %s25, 0
      %p110 = por %p108, %p109
      %p111 = scmp.ne.s32.totalorder %s97, %s98
      %p112 = scmp.eq.s32.totalorder %s26, 3
      %p113 = por %p111, %p112
      %p115 = scmp.ne.s32.totalorder %s98, %s114
      %p116 = scmp.eq.s32.totalorder %s26, 0
      %p117 = por %p115, %p116
      %s118 = ssub.s32 %s27, %s39
      %p119 = scmp.eq.s32.totalorder %s118, 0
      %s121 = sadd.s32 %s120, 1
      %s122 = scalar_select %p119, %s120, %s121
      %p125 = pneg %p119
      %p126 = scmp.eq.s32.totalorder %s20, 3
      %p127 = por %p125, %p126
      %p128 = scmp.ne.s32.totalorder %s120, %s123
      %p129 = scmp.eq.s32.totalorder %s20, 0
      %p130 = por %p128, %p129
      %p131 = scmp.ne.s32.totalorder %s120, %s123
      %p132 = scmp.eq.s32.totalorder %s25, 3
      %p133 = por %p131, %p132
      %p134 = scmp.ne.s32.totalorder %s123, %s124
      %p135 = scmp.eq.s32.totalorder %s25, 0
      %p136 = por %p134, %p135
      %p137 = scmp.ne.s32.totalorder %s123, %s124
      %p138 = scmp.eq.s32.totalorder %s26, 3
      %p139 = por %p137, %p138
      %p141 = scmp.ne.s32.totalorder %s124, %s140
      %p142 = scmp.eq.s32.totalorder %s26, 0
      %p143 = por %p141, %p142
      %s145 = sadd.s32 %s144, 1
      %p148 = scmp.eq.s32.totalorder %s20, 3
      %p149 = scmp.ne.s32.totalorder %s144, %s146
      %p150 = scmp.eq.s32.totalorder %s20, 0
      %p151 = por %p149, %p150
      %p152 = scmp.ne.s32.totalorder %s144, %s146
      %p153 = scmp.eq.s32.totalorder %s25, 3
      %p154 = por %p152, %p153
      %p155 = scmp.ne.s32.totalorder %s146, %s147
      %p156 = scmp.eq.s32.totalorder %s25, 0
      %p157 = por %p155, %p156
      %p158 = scmp.ne.s32.totalorder %s146, %s147
      %p159 = scmp.eq.s32.totalorder %s26, 3
      %p160 = por %p158, %p159
      %p162 = scmp.ne.s32.totalorder %s147, %s161
      %p163 = scmp.eq.s32.totalorder %s26, 0
      %p164 = por %p162, %p163
      %s165 = ssub.s32 %s27, %s39
      %s166 = ssub.s32 %s28, %s35
      %s167 = sor.u32 %s165, %s166
      %p168 = scmp.eq.s32.totalorder %s167, 0
      %s170 = sadd.s32 %s169, 1
      %s171 = scalar_select %p168, %s169, %s170
      %p174 = pneg %p168
      %p175 = scmp.eq.s32.totalorder %s20, 3
      %p176 = por %p174, %p175
      %p177 = scmp.ne.s32.totalorder %s169, %s172
      %p178 = scmp.eq.s32.totalorder %s20, 0
      %p179 = por %p177, %p178
      %p180 = scmp.ne.s32.totalorder %s169, %s172
      %p181 = scmp.eq.s32.totalorder %s25, 3
      %p182 = por %p180, %p181
      %p183 = scmp.ne.s32.totalorder %s172, %s173
      %p184 = scmp.eq.s32.totalorder %s25, 0
      %p185 = por %p183, %p184
      %p186 = scmp.ne.s32.totalorder %s172, %s173
      %p187 = scmp.eq.s32.totalorder %s26, 3
      %p188 = por %p186, %p187
      %p190 = scmp.ne.s32.totalorder %s173, %s189
      %p191 = scmp.eq.s32.totalorder %s26, 0
      %p192 = por %p190, %p191
      %s193 = ssub.s32 %s27, %s39
      %s194 = ssub.s32 %s28, %s35
      %s195 = sor.u32 %s193, %s194
      %p196 = scmp.eq.s32.totalorder %s195, 0
      %s198 = sadd.s32 %s197, 1
      %s199 = scalar_select %p196, %s197, %s198
      %p202 = pneg %p196
      %p203 = scmp.eq.s32.totalorder %s20, 3
      %p204 = por %p202, %p203
      %p205 = scmp.ne.s32.totalorder %s197, %s200
      %p206 = scmp.eq.s32.totalorder %s20, 0
      %p207 = por %p205, %p206
      %p208 = scmp.ne.s32.totalorder %s197, %s200
      %p209 = scmp.eq.s32.totalorder %s25, 3
      %p210 = por %p208, %p209
      %p211 = scmp.ne.s32.totalorder %s200, %s201
      %p212 = scmp.eq.s32.totalorder %s25, 0
      %p213 = por %p211, %p212
      %p214 = scmp.ne.s32.totalorder %s200, %s201
      %p215 = scmp.eq.s32.totalorder %s26, 3
      %p216 = por %p214, %p215
      %p218 = scmp.ne.s32.totalorder %s201, %s217
      %p219 = scmp.eq.s32.totalorder %s26, 0
      %p220 = por %p218, %p219
      %s221 = ssub.s32 %s27, %s39
      %s222 = ssub.s32 %s28, %s35
      %s223 = sor.u32 %s221, %s222
      %p224 = scmp.eq.s32.totalorder %s223, 0
      %s226 = sadd.s32 %s225, 1
      %s227 = scalar_select %p224, %s225, %s226
      %p230 = pneg %p224
      %p231 = scmp.eq.s32.totalorder %s20, 3
      %p232 = por %p230, %p231
      %p233 = scmp.ne.s32.totalorder %s225, %s228
      %p234 = scmp.eq.s32.totalorder %s20, 0
      %p235 = por %p233, %p234
      %p236 = scmp.ne.s32.totalorder %s225, %s228
      %p237 = scmp.eq.s32.totalorder %s25, 3
      %p238 = por %p236, %p237
      %p239 = scmp.ne.s32.totalorder %s228, %s229
      %p240 = scmp.eq.s32.totalorder %s25, 0
      %p241 = por %p239, %p240
      %p242 = scmp.ne.s32.totalorder %s228, %s229
      %p243 = scmp.eq.s32.totalorder %s26, 3
      %p244 = por %p242, %p243
      %p246 = scmp.ne.s32.totalorder %s229, %s245
      %p247 = scmp.eq.s32.totalorder %s26, 0
      %p248 = por %p246, %p247
      %p249 = scmp.le.s32.totalorder 1, %s20
      %p250 = scmp.lt.s32.totalorder %s20, 5
      %p251 = pnand %p249, %p250
      %p252 = pneg %p251
      // Predicated region
      $region9: #{tpu_custom_call.1} parent=5 // pred_check
        _
      $region10: #{tpu_custom_call.1} parent=5 // pred_check_branch
        %254 = sbr.rel (%p251) target = $region12
      $region11: #{tpu_custom_call.1} parent=5 // pred_region
        %s255 = ssub.s32 %s20, 1
        // Predicated region
        $region13: #{tpu_custom_call.1} parent=11 // pred_check
          %p256 = pneg %p157
        $region14: #{tpu_custom_call.1} parent=11 // pred_check_branch
          %258 = sbr.rel (%p256) target = $region16
        $region15: #{tpu_custom_call.1} parent=11 // pred_region
          _
        $region16: #{tpu_custom_call.1} parent=11 // pred_fallthru
          _
      $region12: #{tpu_custom_call.1} parent=5 // pred_fallthru
        _
      %p259 = scmp.lt.s32.totalorder %s20, 4
      // Predicated region
      $region17: #{tpu_custom_call.1} parent=5 // pred_check
        %p260 = pneg %p259
      $region18: #{tpu_custom_call.1} parent=5 // pred_check_branch
        %262 = sbr.rel (%p260) target = $region20
      $region19: #{tpu_custom_call.1} parent=5 // pred_region
        // Predicated region
        $region21: #{tpu_custom_call.1} parent=19 // pred_check
          %p263 = pneg %p52
        $region22: #{tpu_custom_call.1} parent=19 // pred_check_branch
          %265 = sbr.rel (%p263) target = $region24
        $region23: #{tpu_custom_call.1} parent=19 // pred_region
          %p266 = scmp.lt.s32.totalorder %s27, 1
          %s267 = scalar_select %p266, %s27, 1
          %s268 = smul.addr %s267, 18
          %s269 = smul.addr %s268, 4
          %s270 = scalar_lea.vmem %s0, %s269
        $region24: #{tpu_custom_call.1} parent=19 // pred_fallthru
          _
        // Predicated region
        $region25: #{tpu_custom_call.1} parent=19 // pred_check
          %p271 = pneg %p78
        $region26: #{tpu_custom_call.1} parent=19 // pred_check_branch
          %273 = sbr.rel (%p271) target = $region28
        $region27: #{tpu_custom_call.1} parent=19 // pred_region
          %p274 = scmp.lt.s32.totalorder %s27, 1
          %s275 = scalar_select %p274, %s27, 1
          %s276 = smul.addr %s275, 18
          %s277 = smul.addr %s276, 4
          %s278 = scalar_lea.vmem %s1, %s277
        $region28: #{tpu_custom_call.1} parent=19 // pred_fallthru
          _
        // Predicated region
        $region29: #{tpu_custom_call.1} parent=19 // pred_check
          %p279 = pneg %p104
        $region30: #{tpu_custom_call.1} parent=19 // pred_check_branch
          %281 = sbr.rel (%p279) target = $region32
        $region31: #{tpu_custom_call.1} parent=19 // pred_region
          %p282 = scmp.lt.s32.totalorder %s27, 1
          %s283 = scalar_select %p282, %s27, 1
          %s284 = smul.addr %s283, 18
          %s285 = smul.addr %s284, 4
          %s286 = scalar_lea.vmem %s2, %s285
        $region32: #{tpu_custom_call.1} parent=19 // pred_fallthru
          _
        // Predicated region
        $region33: #{tpu_custom_call.1} parent=19 // pred_check
          %p287 = pneg %p130
        $region34: #{tpu_custom_call.1} parent=19 // pred_check_branch
          %289 = sbr.rel (%p287) target = $region36
        $region35: #{tpu_custom_call.1} parent=19 // pred_region
          %p290 = scmp.lt.s32.totalorder %s27, 1
          %s291 = scalar_select %p290, %s27, 1
          %s292 = smul.addr %s291, 18
          %s293 = smul.addr %s292, 4
          %s294 = scalar_lea.vmem %s3, %s293
        $region36: #{tpu_custom_call.1} parent=19 // pred_fallthru
          _
      $region20: #{tpu_custom_call.1} parent=5 // pred_fallthru
        _
      %p295 = scmp.le.s32.totalorder 1, %s20
      %p296 = scmp.lt.s32.totalorder %s20, 5
      %p297 = pnand %p295, %p296
      %p298 = pneg %p297
      // Predicated region
      $region37: #{tpu_custom_call.1} parent=5 // pred_check
        _
      $region38: #{tpu_custom_call.1} parent=5 // pred_check_branch
        %300 = sbr.rel (%p297) target = $region40
      $region39: #{tpu_custom_call.1} parent=5 // pred_region
        %s301 = ssub.s32 %s20, 1
        %p302 = scmp.lt.s32.totalorder %s29, 1
        %s303 = scalar_select %p302, %s29, 1
        %s304 = smul.addr %s303, 18
        %s305 = smul.addr %s304, 4
        %s306 = scalar_lea.vmem %s0, %s305
        %p307 = pneg %p58
        %p308 = pneg %p55
        %p309 = scmp.lt.s32.totalorder %s29, 1
        %s310 = scalar_select %p309, %s29, 1
        %s311 = smul.addr %s310, 18
        %s312 = smul.addr %s311, 4
        %s313 = scalar_lea.vmem %s1, %s312
        %p314 = pneg %p84
        %p315 = pneg %p81
        %p316 = scmp.lt.s32.totalorder %s29, 1
        %s317 = scalar_select %p316, %s29, 1
        %s318 = smul.addr %s317, 18
        %s319 = smul.addr %s318, 4
        %s320 = scalar_lea.vmem %s2, %s319
        %p321 = pneg %p110
        %p322 = pneg %p107
        %p323 = scmp.lt.s32.totalorder %s29, 1
        %s324 = scalar_select %p323, %s29, 1
        %s325 = smul.addr %s324, 18
        %s326 = smul.addr %s325, 4
        %s327 = scalar_lea.vmem %s3, %s326
        %p328 = pneg %p136
        %p329 = pneg %p133
        %p330 = pneg %p157
        %p331 = pneg %p154
        %p332 = pneg %p185
        %p333 = pneg %p182
        %s334 = sand.u32 %s172, 1
        %s335 = scalar_lea.sflag [#allocation3], %s334
        %s336 = sand.u32 %s172, 1
        %s337 = smul.addr %s336, 32
        %s338 = scalar_lea.vmem [#allocation2], %s337
        %p339 = pneg %p213
        %p340 = pneg %p210
        %s341 = sand.u32 %s25, 1
        %s342 = scalar_lea.sflag [#allocation5], %s341
        %s343 = sand.u32 %s200, 1
        %s344 = scalar_lea.vmem [#allocation4], %s343
        %p345 = pneg %p241
        %p346 = pneg %p238
        %s347 = sand.u32 %s25, 1
        %s348 = scalar_lea.sflag [#allocation5], %s347
        %s349 = sand.u32 %s228, 1
        %s350 = scalar_lea.vmem [#allocation6], %s349
        %p351 = scmp.lt.s32.totalorder %s29, 1
        %s352 = scalar_select %p351, %s29, 1
        %s353 = smul.addr %s352, 18
        %s354 = smul.addr %s353, 4
        %s355 = scalar_lea.vmem %s0, %s354
        %p356 = scmp.lt.s32.totalorder %s29, 1
        %s357 = scalar_select %p356, %s29, 1
        %s358 = smul.addr %s357, 18
        %s359 = smul.addr %s358, 4
        %s360 = scalar_lea.vmem %s1, %s359
        %p361 = scmp.lt.s32.totalorder %s29, 1
        %s362 = scalar_select %p361, %s29, 1
        %s363 = smul.addr %s362, 18
        %s364 = smul.addr %s363, 4
        %s365 = scalar_lea.vmem %s2, %s364
        %p366 = scmp.lt.s32.totalorder %s29, 1
        %s367 = scalar_select %p366, %s29, 1
        %s368 = smul.addr %s367, 18
        %s369 = smul.addr %s368, 4
        %s370 = scalar_lea.vmem %s3, %s369
        %s371 = smul.u32 4, %s30
        %s373 = smul.u32 %s30, 4
        %s374 = smul.u32 %s373, 2
        %s375 = smul.addr %s374, 4
        %s376 = scalar_lea.vmem %s355, %s375
        %v377 = vld [vmem:[%s376] sm:$0xf]
        %v378 = vld [vmem:[%s376 + $0x8] sm:$0xf]
        %v379 = vld [vmem:[%s376 + $0x10] sm:$0xf]
        %v380 = vld [vmem:[%s376 + $0x18] sm:$0xf]
        %v381 = vld [vmem:[%s4] sm:$0xf]
        %v382 = vld [vmem:[%s4 + $0x4] sm:$0xf]
        %v383 = vld [vmem:[%s4 + $0x8] sm:$0xf]
        %v384 = vld [vmem:[%s4 + $0xc] sm:$0xf]
        %s385 = smul.addr %s374, 4
        %s386 = scalar_lea.vmem %s360, %s385
        %v387 = vld [vmem:[%s386] sm:$0xf]
        %v388 = vld [vmem:[%s386 + $0x8] sm:$0xf]
        %v389 = vld [vmem:[%s386 + $0x10] sm:$0xf]
        %v390 = vld [vmem:[%s386 + $0x18] sm:$0xf]
        %s391 = scalar_lea.vmem %s4, 16
        %v392 = vld [vmem:[%s391] sm:$0xf]
        %v393 = vld [vmem:[%s391 + $0x4] sm:$0xf]
        %v394 = vld [vmem:[%s391 + $0x8] sm:$0xf]
        %v395 = vld [vmem:[%s391 + $0xc] sm:$0xf]
        %v400 = vunpack.c.l.b16 %v387
        %v401 = vunpack.c.l.b16 %v388
        %v402 = vunpack.c.l.b16 %v389
        %v403 = vunpack.c.l.b16 %v390
        %v404 = vpack.c.b16 %v401, %v400
        %v405 = vpack.c.b16 %v403, %v402
        %v410 = vunpack.c.l.b16 %v392
        %v411 = vunpack.c.l.b16 %v393
        %v412 = vunpack.c.l.b16 %v394
        %v413 = vunpack.c.l.b16 %v395
        %v414 = vpack.c.b16 %v411, %v410
        %v415 = vpack.c.b16 %v413, %v412
        %vm418 = vcmask 261120
        %v420 = vsel %vm418, %v404, 0
        %v423 = vsel %vm418, %v405, 0
        %425 = vmatprep.subr.bf16.mxu0 0
        %426 = vmatpush1.bf16.msra.mxu0 %v414
        %427 = vmatprep.subr.bf16.mxu0 0
        %428 = vmatpush1.bf16.msra.mxu0 %v415
        %429 = vmatprep.subr.bf16.mxu0 0
        %430 = vmatpush1.bf16.msra.mxu0 0
        %431 = vmatprep.subr.bf16.mxu0 0
        %432 = vmatpush1.bf16.msra.mxu0 0
        %433 = vmatprep.subr.bf16.mxu0 0
        %434 = vmatpush1.bf16.msra.mxu0 0
        %435 = vmatprep.subr.bf16.mxu0 0
        %436 = vmatpush1.bf16.msra.mxu0 0
        %437 = vmatprep.subr.bf16.mxu0 0
        %438 = vmatpush1.bf16.msra.mxu0 0
        %439 = vmatprep.subr.bf16.mxu0 0
        %440 = vmatpush1.bf16.msra.mxu0 0
        %441 = vmatprep.subr.bf16.mxu0 0
        %442 = vmatpush1.bf16.msra.mxu0 0
        %443 = vmatprep.subr.bf16.mxu0 0
        %444 = vmatpush1.bf16.msra.mxu0 0
        %445 = vmatprep.subr.bf16.mxu0 0
        %446 = vmatpush1.bf16.msra.mxu0 0
        %447 = vmatprep.subr.bf16.mxu0 0
        %448 = vmatpush1.bf16.msra.mxu0 0
        %449 = vmatprep.subr.bf16.mxu0 0
        %450 = vmatpush1.bf16.msra.mxu0 0
        %451 = vmatprep.subr.bf16.mxu0 0
        %452 = vmatpush1.bf16.msra.mxu0 0
        %453 = vmatprep.subr.bf16.mxu0 0
        %454 = vmatpush1.bf16.msra.mxu0 0
        %455 = vmatprep.subr.bf16.mxu0 0
        %456 = vmatpush1.bf16.msra.mxu0 0
        %457 = vmatprep.mubr.bf16.mxu0 0
        %458 = vmatmul.mubr.bf16.gmra.mrb[0].mxu0 %v420
        %v459 = vpop.f32.mrb[0].mxu0
        %v460 = vadd.f32 0.0, %v459
        %v461 = vpop.f32.mrb[0].mxu0
        %v462 = vpop.f32.mrb[0].mxu0
        %v463 = vadd.f32 0.0, %v462
        %v464 = vpop.f32.mrb[0].mxu0
        %465 = vmatprep.mubr.bf16.mxu0 0
        %466 = vmatmul.mubr.bf16.gmra.mrb[0].mxu0 %v423
        %v467 = vpop.f32.mrb[0].mxu0
        %v468 = vadd.f32 0.0, %v467
        %v469 = vpop.f32.mrb[0].mxu0
        %v470 = vpop.f32.mrb[0].mxu0
        %v471 = vadd.f32 0.0, %v470
        %v472 = vpop.f32.mrb[0].mxu0
        %473 = vdwg.mxu0
        %v478 = vunpack.c.l.b16 %v377
        %v479 = vunpack.c.l.b16 %v378
        %v480 = vunpack.c.l.b16 %v379
        %v481 = vunpack.c.l.b16 %v380
        %v482 = vpack.c.b16 %v479, %v478
        %v483 = vpack.c.b16 %v481, %v480
        %v488 = vunpack.c.l.b16 %v381
        %v489 = vunpack.c.l.b16 %v382
        %v490 = vunpack.c.l.b16 %v383
        %v491 = vunpack.c.l.b16 %v384
        %v492 = vpack.c.b16 %v489, %v488
        %v493 = vpack.c.b16 %v491, %v490
        %v497 = vsel %vm418, %v482, 0
        %v500 = vsel %vm418, %v483, 0
        %502 = vmatprep.subr.bf16.mxu0 0
        %503 = vmatpush1.bf16.msra.mxu0 %v492
        %504 = vmatprep.subr.bf16.mxu0 0
        %505 = vmatpush1.bf16.msra.mxu0 %v493
        %506 = vmatprep.subr.bf16.mxu0 0
        %507 = vmatpush1.bf16.msra.mxu0 0
        %508 = vmatprep.subr.bf16.mxu0 0
        %509 = vmatpush1.bf16.msra.mxu0 0
        %510 = vmatprep.subr.bf16.mxu0 0
        %511 = vmatpush1.bf16.msra.mxu0 0
        %512 = vmatprep.subr.bf16.mxu0 0
        %513 = vmatpush1.bf16.msra.mxu0 0
        %514 = vmatprep.subr.bf16.mxu0 0
        %515 = vmatpush1.bf16.msra.mxu0 0
        %516 = vmatprep.subr.bf16.mxu0 0
        %517 = vmatpush1.bf16.msra.mxu0 0
        %518 = vmatprep.subr.bf16.mxu0 0
        %519 = vmatpush1.bf16.msra.mxu0 0
        %520 = vmatprep.subr.bf16.mxu0 0
        %521 = vmatpush1.bf16.msra.mxu0 0
        %522 = vmatprep.subr.bf16.mxu0 0
        %523 = vmatpush1.bf16.msra.mxu0 0
        %524 = vmatprep.subr.bf16.mxu0 0
        %525 = vmatpush1.bf16.msra.mxu0 0
        %526 = vmatprep.subr.bf16.mxu0 0
        %527 = vmatpush1.bf16.msra.mxu0 0
        %528 = vmatprep.subr.bf16.mxu0 0
        %529 = vmatpush1.bf16.msra.mxu0 0
        %530 = vmatprep.subr.bf16.mxu0 0
        %531 = vmatpush1.bf16.msra.mxu0 0
        %532 = vmatprep.subr.bf16.mxu0 0
        %533 = vmatpush1.bf16.msra.mxu0 0
        %534 = vmatprep.mubr.bf16.mxu0 0
        %535 = vmatmul.mubr.bf16.gmra.mrb[0].mxu0 %v497
        %v536 = vpop.f32.mrb[0].mxu0
        %v537 = vadd.f32 %v460, %v536
        %v538 = vpop.f32.mrb[0].mxu0
        %v539 = vpop.f32.mrb[0].mxu0
        %v540 = vadd.f32 %v463, %v539
        %v541 = vpop.f32.mrb[0].mxu0
        %542 = vmatprep.mubr.bf16.mxu0 0
        %543 = vmatmul.mubr.bf16.gmra.mrb[0].mxu0 %v500
        %v544 = vpop.f32.mrb[0].mxu0
        %v545 = vadd.f32 %v468, %v544
        %v546 = vpop.f32.mrb[0].mxu0
        %v547 = vpop.f32.mrb[0].mxu0
        %v548 = vadd.f32 %v471, %v547
        %v549 = vpop.f32.mrb[0].mxu0
        %550 = vdwg.mxu0
        %v551 = vld [vmem:[%s376] sm:$0xf]
        %v552 = vld [vmem:[%s376 + $0x4] sm:$0x1]
        %v553 = vld [vmem:[%s376 + $0x8] sm:$0xf]
        %v554 = vld [vmem:[%s376 + $0xc] sm:$0x1]
        %v555 = vld [vmem:[%s376 + $0x10] sm:$0xf]
        %v556 = vld [vmem:[%s376 + $0x14] sm:$0x1]
        %v557 = vld [vmem:[%s376 + $0x18] sm:$0xf]
        %v558 = vld [vmem:[%s376 + $0x1c] sm:$0x1]
        %vm559 = vsmask.f32 3328
        %vm560 = vsmask.f32 7440
        %vm561 = vmor %vm559, %vm560
        %v563 = vshrl.u32 %v551, 16
        %v565 = vrot.slane %v563, 4
        %v566 = vshll.u32 %v551, 16
        %v568 = vrot.slane %v566, 5
        %v569 = vor.u32 %v565, %v568
        %v570 = vrot.slane %v569, 4
        %v572 = vshll.u32 %v552, 16
        %v574 = vrot.slane %v572, 5
        %v575 = vsel %vm561, %v570, %v574
        %v577 = vshrl.u32 %v553, 16
        %v579 = vrot.slane %v577, 4
        %v580 = vshll.u32 %v553, 16
        %v582 = vrot.slane %v580, 5
        %v583 = vor.u32 %v579, %v582
        %v584 = vrot.slane %v583, 4
        %v586 = vshll.u32 %v554, 16
        %v588 = vrot.slane %v586, 5
        %v589 = vsel %vm561, %v584, %v588
        %v591 = vshrl.u32 %v555, 16
        %v593 = vrot.slane %v591, 4
        %v594 = vshll.u32 %v555, 16
        %v596 = vrot.slane %v594, 5
        %v597 = vor.u32 %v593, %v596
        %v598 = vrot.slane %v597, 4
        %v600 = vshll.u32 %v556, 16
        %v602 = vrot.slane %v600, 5
        %v603 = vsel %vm561, %v598, %v602
        %v605 = vshrl.u32 %v557, 16
        %v607 = vrot.slane %v605, 4
        %v608 = vshll.u32 %v557, 16
        %v610 = vrot.slane %v608, 5
        %v611 = vor.u32 %v607, %v610
        %v612 = vrot.slane %v611, 4
        %v614 = vshll.u32 %v558, 16
        %v616 = vrot.slane %v614, 5
        %v617 = vsel %vm561, %v612, %v616
        %s618 = scalar_lea.vmem %s4, 32
        %v619 = vld [vmem:[%s618] sm:$0xf]
        %v620 = vld [vmem:[%s618 + $0x4] sm:$0xf]
        %v621 = vld [vmem:[%s618 + $0x8] sm:$0xf]
        %v622 = vld [vmem:[%s618 + $0xc] sm:$0xf]
        %v623 = vunpack.c.l.b16 %v575
        %v624 = vunpack.c.l.b16 %v589
        %v625 = vunpack.c.l.b16 %v603
        %v626 = vunpack.c.l.b16 %v617
        %v627 = vpack.c.b16 %v624, %v623
        %v628 = vpack.c.b16 %v626, %v625
        %v633 = vunpack.c.l.b16 %v619
        %v634 = vunpack.c.l.b16 %v620
        %v635 = vunpack.c.l.b16 %v621
        %v636 = vunpack.c.l.b16 %v622
        %v637 = vpack.c.b16 %v634, %v633
        %v638 = vpack.c.b16 %v636, %v635
        %v642 = vsel %vm418, %v627, 0
        %v645 = vsel %vm418, %v628, 0
        %647 = vmatprep.subr.bf16.mxu0 0
        %648 = vmatpush1.bf16.msra.mxu0 %v637
        %649 = vmatprep.subr.bf16.mxu0 0
        %650 = vmatpush1.bf16.msra.mxu0 %v638
        %651 = vmatprep.subr.bf16.mxu0 0
        %652 = vmatpush1.bf16.msra.mxu0 0
        %653 = vmatprep.subr.bf16.mxu0 0
        %654 = vmatpush1.bf16.msra.mxu0 0
        %655 = vmatprep.subr.bf16.mxu0 0
        %656 = vmatpush1.bf16.msra.mxu0 0
        %657 = vmatprep.subr.bf16.mxu0 0
        %658 = vmatpush1.bf16.msra.mxu0 0
        %659 = vmatprep.subr.bf16.mxu0 0
        %660 = vmatpush1.bf16.msra.mxu0 0
        %661 = vmatprep.subr.bf16.mxu0 0
        %662 = vmatpush1.bf16.msra.mxu0 0
        %663 = vmatprep.subr.bf16.mxu0 0
        %664 = vmatpush1.bf16.msra.mxu0 0
        %665 = vmatprep.subr.bf16.mxu0 0
        %666 = vmatpush1.bf16.msra.mxu0 0
        %667 = vmatprep.subr.bf16.mxu0 0
        %668 = vmatpush1.bf16.msra.mxu0 0
        %669 = vmatprep.subr.bf16.mxu0 0
        %670 = vmatpush1.bf16.msra.mxu0 0
        %671 = vmatprep.subr.bf16.mxu0 0
        %672 = vmatpush1.bf16.msra.mxu0 0
        %673 = vmatprep.subr.bf16.mxu0 0
        %674 = vmatpush1.bf16.msra.mxu0 0
        %675 = vmatprep.subr.bf16.mxu0 0
        %676 = vmatpush1.bf16.msra.mxu0 0
        %677 = vmatprep.subr.bf16.mxu0 0
        %678 = vmatpush1.bf16.msra.mxu0 0
        %679 = vmatprep.mubr.bf16.mxu0 0
        %680 = vmatmul.mubr.bf16.gmra.mrb[0].mxu0 %v642
        %v681 = vpop.f32.mrb[0].mxu0
        %v682 = vadd.f32 0.0, %v681
        %v683 = vpop.f32.mrb[0].mxu0
        %v684 = vpop.f32.mrb[0].mxu0
        %v685 = vadd.f32 0.0, %v684
        %v686 = vpop.f32.mrb[0].mxu0
        %687 = vmatprep.mubr.bf16.mxu0 0
        %688 = vmatmul.mubr.bf16.gmra.mrb[0].mxu0 %v645
        %v689 = vpop.f32.mrb[0].mxu0
        %v690 = vadd.f32 0.0, %v689
        %v691 = vpop.f32.mrb[0].mxu0
        %v692 = vpop.f32.mrb[0].mxu0
        %v693 = vadd.f32 0.0, %v692
        %v694 = vpop.f32.mrb[0].mxu0
        %695 = vdwg.mxu0
        %v696 = vadd.f32 %v537, %v682
        %v697 = vadd.f32 %v540, %v685
        %v698 = vadd.f32 %v545, %v690
        %v699 = vadd.f32 %v548, %v693
        %s700 = smul.addr %s374, 4
        %s701 = scalar_lea.vmem %s365, %s700
        %v702 = vld [vmem:[%s701] sm:$0xf]
        %v703 = vld [vmem:[%s701 + $0x8] sm:$0xf]
        %v704 = vld [vmem:[%s701 + $0x10] sm:$0xf]
        %v705 = vld [vmem:[%s701 + $0x18] sm:$0xf]
        %s706 = scalar_lea.vmem %s4, 48
        %v707 = vld [vmem:[%s706] sm:$0xf]
        %v708 = vld [vmem:[%s706 + $0x4] sm:$0xf]
        %v709 = vld [vmem:[%s706 + $0x8] sm:$0xf]
        %v710 = vld [vmem:[%s706 + $0xc] sm:$0xf]
        %v715 = vunpack.c.l.b16 %v702
        %v716 = vunpack.c.l.b16 %v703
        %v717 = vunpack.c.l.b16 %v704
        %v718 = vunpack.c.l.b16 %v705
        %v719 = vpack.c.b16 %v716, %v715
        %v720 = vpack.c.b16 %v718, %v717
        %v725 = vunpack.c.l.b16 %v707
        %v726 = vunpack.c.l.b16 %v708
        %v727 = vunpack.c.l.b16 %v709
        %v728 = vunpack.c.l.b16 %v710
        %v729 = vpack.c.b16 %v726, %v725
        %v730 = vpack.c.b16 %v728, %v727
        %v734 = vsel %vm418, %v719, 0
        %v737 = vsel %vm418, %v720, 0
        %739 = vmatprep.subr.bf16.mxu0 0
        %740 = vmatpush1.bf16.msra.mxu0 %v729
        %741 = vmatprep.subr.bf16.mxu0 0
        %742 = vmatpush1.bf16.msra.mxu0 %v730
        %743 = vmatprep.subr.bf16.mxu0 0
        %744 = vmatpush1.bf16.msra.mxu0 0
        %745 = vmatprep.subr.bf16.mxu0 0
        %746 = vmatpush1.bf16.msra.mxu0 0
        %747 = vmatprep.subr.bf16.mxu0 0
        %748 = vmatpush1.bf16.msra.mxu0 0
        %749 = vmatprep.subr.bf16.mxu0 0
        %750 = vmatpush1.bf16.msra.mxu0 0
        %751 = vmatprep.subr.bf16.mxu0 0
        %752 = vmatpush1.bf16.msra.mxu0 0
        %753 = vmatprep.subr.bf16.mxu0 0
        %754 = vmatpush1.bf16.msra.mxu0 0
        %755 = vmatprep.subr.bf16.mxu0 0
        %756 = vmatpush1.bf16.msra.mxu0 0
        %757 = vmatprep.subr.bf16.mxu0 0
        %758 = vmatpush1.bf16.msra.mxu0 0
        %759 = vmatprep.subr.bf16.mxu0 0
        %760 = vmatpush1.bf16.msra.mxu0 0
        %761 = vmatprep.subr.bf16.mxu0 0
        %762 = vmatpush1.bf16.msra.mxu0 0
        %763 = vmatprep.subr.bf16.mxu0 0
        %764 = vmatpush1.bf16.msra.mxu0 0
        %765 = vmatprep.subr.bf16.mxu0 0
        %766 = vmatpush1.bf16.msra.mxu0 0
        %767 = vmatprep.subr.bf16.mxu0 0
        %768 = vmatpush1.bf16.msra.mxu0 0
        %769 = vmatprep.subr.bf16.mxu0 0
        %770 = vmatpush1.bf16.msra.mxu0 0
        %771 = vmatprep.mubr.bf16.mxu0 0
        %772 = vmatmul.mubr.bf16.gmra.mrb[0].mxu0 %v734
        %v773 = vpop.f32.mrb[0].mxu0
        %v774 = vadd.f32 0.0, %v773
        %v775 = vpop.f32.mrb[0].mxu0
        %v776 = vpop.f32.mrb[0].mxu0
        %v777 = vadd.f32 0.0, %v776
        %v778 = vpop.f32.mrb[0].mxu0
        %779 = vmatprep.mubr.bf16.mxu0 0
        %780 = vmatmul.mubr.bf16.gmra.mrb[0].mxu0 %v737
        %v781 = vpop.f32.mrb[0].mxu0
        %v782 = vadd.f32 0.0, %v781
        %v783 = vpop.f32.mrb[0].mxu0
        %v784 = vpop.f32.mrb[0].mxu0
        %v785 = vadd.f32 0.0, %v784
        %v786 = vpop.f32.mrb[0].mxu0
        %787 = vdwg.mxu0
        %v788 = vadd.f32 %v696, %v774
        %v789 = vadd.f32 %v697, %v777
        %v790 = vadd.f32 %v698, %v782
        %v791 = vadd.f32 %v699, %v785
        %s792 = smul.addr %s374, 4
        %s793 = scalar_lea.vmem %s370, %s792
        %v794 = vld [vmem:[%s793] sm:$0xf]
        %v795 = vld [vmem:[%s793 + $0x8] sm:$0xf]
        %v796 = vld [vmem:[%s793 + $0x10] sm:$0xf]
        %v797 = vld [vmem:[%s793 + $0x18] sm:$0xf]
        %s798 = scalar_lea.vmem %s4, 64
        %v799 = vld [vmem:[%s798] sm:$0xf]
        %v800 = vld [vmem:[%s798 + $0x4] sm:$0xf]
        %v801 = vld [vmem:[%s798 + $0x8] sm:$0xf]
        %v802 = vld [vmem:[%s798 + $0xc] sm:$0xf]
        %v807 = vunpack.c.l.b16 %v794
        %v808 = vunpack.c.l.b16 %v795
        %v809 = vunpack.c.l.b16 %v796
        %v810 = vunpack.c.l.b16 %v797
        %v811 = vpack.c.b16 %v808, %v807
        %v812 = vpack.c.b16 %v810, %v809
        %v817 = vunpack.c.l.b16 %v799
        %v818 = vunpack.c.l.b16 %v800
        %v819 = vunpack.c.l.b16 %v801
        %v820 = vunpack.c.l.b16 %v802
        %v821 = vpack.c.b16 %v818, %v817
        %v822 = vpack.c.b16 %v820, %v819
        %v826 = vsel %vm418, %v811, 0
        %v829 = vsel %vm418, %v812, 0
        %831 = vmatprep.subr.bf16.mxu0 0
        %832 = vmatpush1.bf16.msra.mxu0 %v821
        %833 = vmatprep.subr.bf16.mxu0 0
        %834 = vmatpush1.bf16.msra.mxu0 %v822
        %835 = vmatprep.subr.bf16.mxu0 0
        %836 = vmatpush1.bf16.msra.mxu0 0
        %837 = vmatprep.subr.bf16.mxu0 0
        %838 = vmatpush1.bf16.msra.mxu0 0
        %839 = vmatprep.subr.bf16.mxu0 0
        %840 = vmatpush1.bf16.msra.mxu0 0
        %841 = vmatprep.subr.bf16.mxu0 0
        %842 = vmatpush1.bf16.msra.mxu0 0
        %843 = vmatprep.subr.bf16.mxu0 0
        %844 = vmatpush1.bf16.msra.mxu0 0
        %845 = vmatprep.subr.bf16.mxu0 0
        %846 = vmatpush1.bf16.msra.mxu0 0
        %847 = vmatprep.subr.bf16.mxu0 0
        %848 = vmatpush1.bf16.msra.mxu0 0
        %849 = vmatprep.subr.bf16.mxu0 0
        %850 = vmatpush1.bf16.msra.mxu0 0
        %851 = vmatprep.subr.bf16.mxu0 0
        %852 = vmatpush1.bf16.msra.mxu0 0
        %853 = vmatprep.subr.bf16.mxu0 0
        %854 = vmatpush1.bf16.msra.mxu0 0
        %855 = vmatprep.subr.bf16.mxu0 0
        %856 = vmatpush1.bf16.msra.mxu0 0
        %857 = vmatprep.subr.bf16.mxu0 0
        %858 = vmatpush1.bf16.msra.mxu0 0
        %859 = vmatprep.subr.bf16.mxu0 0
        %860 = vmatpush1.bf16.msra.mxu0 0
        %861 = vmatprep.subr.bf16.mxu0 0
        %862 = vmatpush1.bf16.msra.mxu0 0
        %863 = vmatprep.mubr.bf16.mxu0 0
        %864 = vmatmul.mubr.bf16.gmra.mrb[0].mxu0 %v826
        %v865 = vpop.f32.mrb[0].mxu0
        %v866 = vadd.f32 0.0, %v865
        %v867 = vpop.f32.mrb[0].mxu0
        %v868 = vpop.f32.mrb[0].mxu0
        %v869 = vadd.f32 0.0, %v868
        %v870 = vpop.f32.mrb[0].mxu0
        %871 = vmatprep.mubr.bf16.mxu0 0
        %872 = vmatmul.mubr.bf16.gmra.mrb[0].mxu0 %v829
        %v873 = vpop.f32.mrb[0].mxu0
        %v874 = vadd.f32 0.0, %v873
        %v875 = vpop.f32.mrb[0].mxu0
        %v876 = vpop.f32.mrb[0].mxu0
        %v877 = vadd.f32 0.0, %v876
        %v878 = vpop.f32.mrb[0].mxu0
        %879 = vdwg.mxu0
        %v880 = vadd.f32 %v788, %v866
        %v881 = vadd.f32 %v789, %v869
        %v882 = vadd.f32 %v790, %v874
        %v883 = vadd.f32 %v791, %v877
        %v884 = vld [vmem:[%s701] sm:$0xf]
        %v885 = vld [vmem:[%s701 + $0x4] sm:$0x1]
        %v886 = vld [vmem:[%s701 + $0x8] sm:$0xf]
        %v887 = vld [vmem:[%s701 + $0xc] sm:$0x1]
        %v888 = vld [vmem:[%s701 + $0x10] sm:$0xf]
        %v889 = vld [vmem:[%s701 + $0x14] sm:$0x1]
        %v890 = vld [vmem:[%s701 + $0x18] sm:$0xf]
        %v891 = vld [vmem:[%s701 + $0x1c] sm:$0x1]
        %v893 = vshrl.u32 %v884, 16
        %v895 = vrot.slane %v893, 4
        %v896 = vshll.u32 %v884, 16
        %v898 = vrot.slane %v896, 5
        %v899 = vor.u32 %v895, %v898
        %v900 = vrot.slane %v899, 4
        %v902 = vshll.u32 %v885, 16
        %v904 = vrot.slane %v902, 5
        %v905 = vsel %vm561, %v900, %v904
        %v907 = vshrl.u32 %v886, 16
        %v909 = vrot.slane %v907, 4
        %v910 = vshll.u32 %v886, 16
        %v912 = vrot.slane %v910, 5
        %v913 = vor.u32 %v909, %v912
        %v914 = vrot.slane %v913, 4
        %v916 = vshll.u32 %v887, 16
        %v918 = vrot.slane %v916, 5
        %v919 = vsel %vm561, %v914, %v918
        %v921 = vshrl.u32 %v888, 16
        %v923 = vrot.slane %v921, 4
        %v924 = vshll.u32 %v888, 16
        %v926 = vrot.slane %v924, 5
        %v927 = vor.u32 %v923, %v926
        %v928 = vrot.slane %v927, 4
        %v930 = vshll.u32 %v889, 16
        %v932 = vrot.slane %v930, 5
        %v933 = vsel %vm561, %v928, %v932
        %v935 = vshrl.u32 %v890, 16
        %v937 = vrot.slane %v935, 4
        %v938 = vshll.u32 %v890, 16
        %v940 = vrot.slane %v938, 5
        %v941 = vor.u32 %v937, %v940
        %v942 = vrot.slane %v941, 4
        %v944 = vshll.u32 %v891, 16
        %v946 = vrot.slane %v944, 5
        %v947 = vsel %vm561, %v942, %v946
        %s948 = scalar_lea.vmem %s4, 80
        %v949 = vld [vmem:[%s948] sm:$0xf]
        %v950 = vld [vmem:[%s948 + $0x4] sm:$0xf]
        %v951 = vld [vmem:[%s948 + $0x8] sm:$0xf]
        %v952 = vld [vmem:[%s948 + $0xc] sm:$0xf]
        %v953 = vunpack.c.l.b16 %v905
        %v954 = vunpack.c.l.b16 %v919
        %v955 = vunpack.c.l.b16 %v933
        %v956 = vunpack.c.l.b16 %v947
        %v957 = vpack.c.b16 %v954, %v953
        %v958 = vpack.c.b16 %v956, %v955
        %v963 = vunpack.c.l.b16 %v949
        %v964 = vunpack.c.l.b16 %v950
        %v965 = vunpack.c.l.b16 %v951
        %v966 = vunpack.c.l.b16 %v952
        %v967 = vpack.c.b16 %v964, %v963
        %v968 = vpack.c.b16 %v966, %v965
        %v972 = vsel %vm418, %v957, 0
        %v975 = vsel %vm418, %v958, 0
        %977 = vmatprep.subr.bf16.mxu0 0
        %978 = vmatpush1.bf16.msra.mxu0 %v967
        %979 = vmatprep.subr.bf16.mxu0 0
        %980 = vmatpush1.bf16.msra.mxu0 %v968
        %981 = vmatprep.subr.bf16.mxu0 0
        %982 = vmatpush1.bf16.msra.mxu0 0
        %983 = vmatprep.subr.bf16.mxu0 0
        %984 = vmatpush1.bf16.msra.mxu0 0
        %985 = vmatprep.subr.bf16.mxu0 0
        %986 = vmatpush1.bf16.msra.mxu0 0
        %987 = vmatprep.subr.bf16.mxu0 0
        %988 = vmatpush1.bf16.msra.mxu0 0
        %989 = vmatprep.subr.bf16.mxu0 0
        %990 = vmatpush1.bf16.msra.mxu0 0
        %991 = vmatprep.subr.bf16.mxu0 0
        %992 = vmatpush1.bf16.msra.mxu0 0
        %993 = vmatprep.subr.bf16.mxu0 0
        %994 = vmatpush1.bf16.msra.mxu0 0
        %995 = vmatprep.subr.bf16.mxu0 0
        %996 = vmatpush1.bf16.msra.mxu0 0
        %997 = vmatprep.subr.bf16.mxu0 0
        %998 = vmatpush1.bf16.msra.mxu0 0
        %999 = vmatprep.subr.bf16.mxu0 0
        %1000 = vmatpush1.bf16.msra.mxu0 0
        %1001 = vmatprep.subr.bf16.mxu0 0
        %1002 = vmatpush1.bf16.msra.mxu0 0
        %1003 = vmatprep.subr.bf16.mxu0 0
        %1004 = vmatpush1.bf16.msra.mxu0 0
        %1005 = vmatprep.subr.bf16.mxu0 0
        %1006 = vmatpush1.bf16.msra.mxu0 0
        %1007 = vmatprep.subr.bf16.mxu0 0
        %1008 = vmatpush1.bf16.msra.mxu0 0
        %1009 = vmatprep.mubr.bf16.mxu0 0
        %1010 = vmatmul.mubr.bf16.gmra.mrb[0].mxu0 %v972
        %v1011 = vpop.f32.mrb[0].mxu0
        %v1012 = vadd.f32 0.0, %v1011
        %v1013 = vpop.f32.mrb[0].mxu0
        %v1014 = vpop.f32.mrb[0].mxu0
        %v1015 = vadd.f32 0.0, %v1014
        %v1016 = vpop.f32.mrb[0].mxu0
        %1017 = vmatprep.mubr.bf16.mxu0 0
        %1018 = vmatmul.mubr.bf16.gmra.mrb[0].mxu0 %v975
        %v1019 = vpop.f32.mrb[0].mxu0
        %v1020 = vadd.f32 0.0, %v1019
        %v1021 = vpop.f32.mrb[0].mxu0
        %v1022 = vpop.f32.mrb[0].mxu0
        %v1023 = vadd.f32 0.0, %v1022
        %v1024 = vpop.f32.mrb[0].mxu0
        %1025 = vdwg.mxu0
        %v1026 = vadd.f32 %v880, %v1012
        %v1027 = vadd.f32 %v881, %v1015
        %v1028 = vadd.f32 %v882, %v1020
        %v1029 = vadd.f32 %v883, %v1023
        %s1030 = sadd.s32 %s373, 1
        %s1031 = smul.u32 %s1030, 2
        %s1032 = smul.addr %s1031, 4
        %s1033 = scalar_lea.vmem %s355, %s1032
        %v1034 = vld [vmem:[%s1033] sm:$0xf]
        %v1035 = vld [vmem:[%s1033 + $0x8] sm:$0xf]
        %v1036 = vld [vmem:[%s1033 + $0x10] sm:$0xf]
        %v1037 = vld [vmem:[%s1033 + $0x18] sm:$0xf]
        %s1038 = scalar_lea.vmem %s4, 96
        %v1039 = vld [vmem:[%s1038] sm:$0xf]
        %v1040 = vld [vmem:[%s1038 + $0x4] sm:$0xf]
        %v1041 = vld [vmem:[%s1038 + $0x8] sm:$0xf]
        %v1042 = vld [vmem:[%s1038 + $0xc] sm:$0xf]
        %v1047 = vunpack.c.l.b16 %v1034
        %v1048 = vunpack.c.l.b16 %v1035
        %v1049 = vunpack.c.l.b16 %v1036
        %v1050 = vunpack.c.l.b16 %v1037
        %v1051 = vpack.c.b16 %v1048, %v1047
        %v1052 = vpack.c.b16 %v1050, %v1049
        %v1057 = vunpack.c.l.b16 %v1039
        %v1058 = vunpack.c.l.b16 %v1040
        %v1059 = vunpack.c.l.b16 %v1041
        %v1060 = vunpack.c.l.b16 %v1042
        %v1061 = vpack.c.b16 %v1058, %v1057
        %v1062 = vpack.c.b16 %v1060, %v1059
        %v1066 = vsel %vm418, %v1051, 0
        %v1069 = vsel %vm418, %v1052, 0
        %1071 = vmatprep.subr.bf16.mxu0 0
        %1072 = vmatpush1.bf16.msra.mxu0 %v1061
        %1073 = vmatprep.subr.bf16.mxu0 0
        %1074 = vmatpush1.bf16.msra.mxu0 %v1062
        %1075 = vmatprep.subr.bf16.mxu0 0
        %1076 = vmatpush1.bf16.msra.mxu0 0
        %1077 = vmatprep.subr.bf16.mxu0 0
        %1078 = vmatpush1.bf16.msra.mxu0 0
        %1079 = vmatprep.subr.bf16.mxu0 0
        %1080 = vmatpush1.bf16.msra.mxu0 0
        %1081 = vmatprep.subr.bf16.mxu0 0
        %1082 = vmatpush1.bf16.msra.mxu0 0
        %1083 = vmatprep.subr.bf16.mxu0 0
        %1084 = vmatpush1.bf16.msra.mxu0 0
        %1085 = vmatprep.subr.bf16.mxu0 0
        %1086 = vmatpush1.bf16.msra.mxu0 0
        %1087 = vmatprep.subr.bf16.mxu0 0
        %1088 = vmatpush1.bf16.msra.mxu0 0
        %1089 = vmatprep.subr.bf16.mxu0 0
        %1090 = vmatpush1.bf16.msra.mxu0 0
        %1091 = vmatprep.subr.bf16.mxu0 0
        %1092 = vmatpush1.bf16.msra.mxu0 0
        %1093 = vmatprep.subr.bf16.mxu0 0
        %1094 = vmatpush1.bf16.msra.mxu0 0
        %1095 = vmatprep.subr.bf16.mxu0 0
        %1096 = vmatpush1.bf16.msra.mxu0 0
        %1097 = vmatprep.subr.bf16.mxu0 0
        %1098 = vmatpush1.bf16.msra.mxu0 0
        %1099 = vmatprep.subr.bf16.mxu0 0
        %1100 = vmatpush1.bf16.msra.mxu0 0
        %1101 = vmatprep.subr.bf16.mxu0 0
        %1102 = vmatpush1.bf16.msra.mxu0 0
        %1103 = vmatprep.mubr.bf16.mxu0 0
        %1104 = vmatmul.mubr.bf16.gmra.mrb[0].mxu0 %v1066
        %v1105 = vpop.f32.mrb[0].mxu0
        %v1106 = vadd.f32 0.0, %v1105
        %v1107 = vpop.f32.mrb[0].mxu0
        %v1108 = vpop.f32.mrb[0].mxu0
        %v1109 = vadd.f32 0.0, %v1108
        %v1110 = vpop.f32.mrb[0].mxu0
        %1111 = vmatprep.mubr.bf16.mxu0 0
        %1112 = vmatmul.mubr.bf16.gmra.mrb[0].mxu0 %v1069
        %v1113 = vpop.f32.mrb[0].mxu0
        %v1114 = vadd.f32 0.0, %v1113
        %v1115 = vpop.f32.mrb[0].mxu0
        %v1116 = vpop.f32.mrb[0].mxu0
        %v1117 = vadd.f32 0.0, %v1116
        %v1118 = vpop.f32.mrb[0].mxu0
        %1119 = vdwg.mxu0
        %v1120 = vadd.f32 %v1026, %v1106
        %v1121 = vadd.f32 %v1027, %v1109
        %v1122 = vadd.f32 %v1028, %v1114
        %v1123 = vadd.f32 %v1029, %v1117
        %s1124 = smul.addr %s1031, 4
        %s1125 = scalar_lea.vmem %s360, %s1124
        %v1126 = vld [vmem:[%s1125] sm:$0xf]
        %v1127 = vld [vmem:[%s1125 + $0x8] sm:$0xf]
        %v1128 = vld [vmem:[%s1125 + $0x10] sm:$0xf]
        %v1129 = vld [vmem:[%s1125 + $0x18] sm:$0xf]
        %s1130 = scalar_lea.vmem %s4, 112
        %v1131 = vld [vmem:[%s1130] sm:$0xf]
        %v1132 = vld [vmem:[%s1130 + $0x4] sm:$0xf]
        %v1133 = vld [vmem:[%s1130 + $0x8] sm:$0xf]
        %v1134 = vld [vmem:[%s1130 + $0xc] sm:$0xf]
        %v1139 = vunpack.c.l.b16 %v1126
        %v1140 = vunpack.c.l.b16 %v1127
        %v1141 = vunpack.c.l.b16 %v1128
        %v1142 = vunpack.c.l.b16 %v1129
        %v1143 = vpack.c.b16 %v1140, %v1139
        %v1144 = vpack.c.b16 %v1142, %v1141
        %v1149 = vunpack.c.l.b16 %v1131
        %v1150 = vunpack.c.l.b16 %v1132
        %v1151 = vunpack.c.l.b16 %v1133
        %v1152 = vunpack.c.l.b16 %v1134
        %v1153 = vpack.c.b16 %v1150, %v1149
        %v1154 = vpack.c.b16 %v1152, %v1151
        %v1158 = vsel %vm418, %v1143, 0
        %v1161 = vsel %vm418, %v1144, 0
        %1163 = vmatprep.subr.bf16.mxu0 0
        %1164 = vmatpush1.bf16.msra.mxu0 %v1153
        %1165 = vmatprep.subr.bf16.mxu0 0
        %1166 = vmatpush1.bf16.msra.mxu0 %v1154
        %1167 = vmatprep.subr.bf16.mxu0 0
        %1168 = vmatpush1.bf16.msra.mxu0 0
        %1169 = vmatprep.subr.bf16.mxu0 0
        %1170 = vmatpush1.bf16.msra.mxu0 0
        %1171 = vmatprep.subr.bf16.mxu0 0
        %1172 = vmatpush1.bf16.msra.mxu0 0
        %1173 = vmatprep.subr.bf16.mxu0 0
        %1174 = vmatpush1.bf16.msra.mxu0 0
        %1175 = vmatprep.subr.bf16.mxu0 0
        %1176 = vmatpush1.bf16.msra.mxu0 0
        %1177 = vmatprep.subr.bf16.mxu0 0
        %1178 = vmatpush1.bf16.msra.mxu0 0
        %1179 = vmatprep.subr.bf16.mxu0 0
        %1180 = vmatpush1.bf16.msra.mxu0 0
        %1181 = vmatprep.subr.bf16.mxu0 0
        %1182 = vmatpush1.bf16.msra.mxu0 0
        %1183 = vmatprep.subr.bf16.mxu0 0
        %1184 = vmatpush1.bf16.msra.mxu0 0
        %1185 = vmatprep.subr.bf16.mxu0 0
        %1186 = vmatpush1.bf16.msra.mxu0 0
        %1187 = vmatprep.subr.bf16.mxu0 0
        %1188 = vmatpush1.bf16.msra.mxu0 0
        %1189 = vmatprep.subr.bf16.mxu0 0
        %1190 = vmatpush1.bf16.msra.mxu0 0
        %1191 = vmatprep.subr.bf16.mxu0 0
        %1192 = vmatpush1.bf16.msra.mxu0 0
        %1193 = vmatprep.subr.bf16.mxu0 0
        %1194 = vmatpush1.bf16.msra.mxu0 0
        %1195 = vmatprep.mubr.bf16.mxu0 0
        %1196 = vmatmul.mubr.bf16.gmra.mrb[0].mxu0 %v1158
        %v1197 = vpop.f32.mrb[0].mxu0
        %v1198 = vadd.f32 0.0, %v1197
        %v1199 = vpop.f32.mrb[0].mxu0
        %v1200 = vpop.f32.mrb[0].mxu0
        %v1201 = vadd.f32 0.0, %v1200
        %v1202 = vpop.f32.mrb[0].mxu0
        %1203 = vmatprep.mubr.bf16.mxu0 0
        %1204 = vmatmul.mubr.bf16.gmra.mrb[0].mxu0 %v1161
        %v1205 = vpop.f32.mrb[0].mxu0
        %v1206 = vadd.f32 0.0, %v1205
        %v1207 = vpop.f32.mrb[0].mxu0
        %v1208 = vpop.f32.mrb[0].mxu0
        %v1209 = vadd.f32 0.0, %v1208
        %v1210 = vpop.f32.mrb[0].mxu0
        %1211 = vdwg.mxu0
        %v1212 = vadd.f32 %v1120, %v1198
        %v1213 = vadd.f32 %v1121, %v1201
        %v1214 = vadd.f32 %v1122, %v1206
        %v1215 = vadd.f32 %v1123, %v1209
        %v1216 = vld [vmem:[%s1033] sm:$0xf]
        %v1217 = vld [vmem:[%s1033 + $0x4] sm:$0x1]
        %v1218 = vld [vmem:[%s1033 + $0x8] sm:$0xf]
        %v1219 = vld [vmem:[%s1033 + $0xc] sm:$0x1]
        %v1220 = vld [vmem:[%s1033 + $0x10] sm:$0xf]
        %v1221 = vld [vmem:[%s1033 + $0x14] sm:$0x1]
        %v1222 = vld [vmem:[%s1033 + $0x18] sm:$0xf]
        %v1223 = vld [vmem:[%s1033 + $0x1c] sm:$0x1]
        %v1225 = vshrl.u32 %v1216, 16
        %v1227 = vrot.slane %v1225, 4
        %v1228 = vshll.u32 %v1216, 16
        %v1230 = vrot.slane %v1228, 5
        %v1231 = vor.u32 %v1227, %v1230
        %v1232 = vrot.slane %v1231, 4
        %v1234 = vshll.u32 %v1217, 16
        %v1236 = vrot.slane %v1234, 5
        %v1237 = vsel %vm561, %v1232, %v1236
        %v1239 = vshrl.u32 %v1218, 16
        %v1241 = vrot.slane %v1239, 4
        %v1242 = vshll.u32 %v1218, 16
        %v1244 = vrot.slane %v1242, 5
        %v1245 = vor.u32 %v1241, %v1244
        %v1246 = vrot.slane %v1245, 4
        %v1248 = vshll.u32 %v1219, 16
        %v1250 = vrot.slane %v1248, 5
        %v1251 = vsel %vm561, %v1246, %v1250
        %v1253 = vshrl.u32 %v1220, 16
        %v1255 = vrot.slane %v1253, 4
        %v1256 = vshll.u32 %v1220, 16
        %v1258 = vrot.slane %v1256, 5
        %v1259 = vor.u32 %v1255, %v1258
        %v1260 = vrot.slane %v1259, 4
        %v1262 = vshll.u32 %v1221, 16
        %v1264 = vrot.slane %v1262, 5
        %v1265 = vsel %vm561, %v1260, %v1264
        %v1267 = vshrl.u32 %v1222, 16
        %v1269 = vrot.slane %v1267, 4
        %v1270 = vshll.u32 %v1222, 16
        %v1272 = vrot.slane %v1270, 5
        %v1273 = vor.u32 %v1269, %v1272
        %v1274 = vrot.slane %v1273, 4
        %v1276 = vshll.u32 %v1223, 16
        %v1278 = vrot.slane %v1276, 5
        %v1279 = vsel %vm561, %v1274, %v1278
        %s1280 = scalar_lea.vmem %s4, 128
        %v1281 = vld [vmem:[%s1280] sm:$0xf]
        %v1282 = vld [vmem:[%s1280 + $0x4] sm:$0xf]
        %v1283 = vld [vmem:[%s1280 + $0x8] sm:$0xf]
        %v1284 = vld [vmem:[%s1280 + $0xc] sm:$0xf]
        %v1285 = vunpack.c.l.b16 %v1237
        %v1286 = vunpack.c.l.b16 %v1251
        %v1287 = vunpack.c.l.b16 %v1265
        %v1288 = vunpack.c.l.b16 %v1279
        %v1289 = vpack.c.b16 %v1286, %v1285
        %v1290 = vpack.c.b16 %v1288, %v1287
        %v1295 = vunpack.c.l.b16 %v1281
        %v1296 = vunpack.c.l.b16 %v1282
        %v1297 = vunpack.c.l.b16 %v1283
        %v1298 = vunpack.c.l.b16 %v1284
        %v1299 = vpack.c.b16 %v1296, %v1295
        %v1300 = vpack.c.b16 %v1298, %v1297
        %v1304 = vsel %vm418, %v1289, 0
        %v1307 = vsel %vm418, %v1290, 0
        %1309 = vmatprep.subr.bf16.mxu0 0
        %1310 = vmatpush1.bf16.msra.mxu0 %v1299
        %1311 = vmatprep.subr.bf16.mxu0 0
        %1312 = vmatpush1.bf16.msra.mxu0 %v1300
        %1313 = vmatprep.subr.bf16.mxu0 0
        %1314 = vmatpush1.bf16.msra.mxu0 0
        %1315 = vmatprep.subr.bf16.mxu0 0
        %1316 = vmatpush1.bf16.msra.mxu0 0
        %1317 = vmatprep.subr.bf16.mxu0 0
        %1318 = vmatpush1.bf16.msra.mxu0 0
        %1319 = vmatprep.subr.bf16.mxu0 0
        %1320 = vmatpush1.bf16.msra.mxu0 0
        %1321 = vmatprep.subr.bf16.mxu0 0
        %1322 = vmatpush1.bf16.msra.mxu0 0
        %1323 = vmatprep.subr.bf16.mxu0 0
        %1324 = vmatpush1.bf16.msra.mxu0 0
        %1325 = vmatprep.subr.bf16.mxu0 0
        %1326 = vmatpush1.bf16.msra.mxu0 0
        %1327 = vmatprep.subr.bf16.mxu0 0
        %1328 = vmatpush1.bf16.msra.mxu0 0
        %1329 = vmatprep.subr.bf16.mxu0 0
        %1330 = vmatpush1.bf16.msra.mxu0 0
        %1331 = vmatprep.subr.bf16.mxu0 0
        %1332 = vmatpush1.bf16.msra.mxu0 0
        %1333 = vmatprep.subr.bf16.mxu0 0
        %1334 = vmatpush1.bf16.msra.mxu0 0
        %1335 = vmatprep.subr.bf16.mxu0 0
        %1336 = vmatpush1.bf16.msra.mxu0 0
        %1337 = vmatprep.subr.bf16.mxu0 0
        %1338 = vmatpush1.bf16.msra.mxu0 0
        %1339 = vmatprep.subr.bf16.mxu0 0
        %1340 = vmatpush1.bf16.msra.mxu0 0
        %1341 = vmatprep.mubr.bf16.mxu0 0
        %1342 = vmatmul.mubr.bf16.gmra.mrb[0].mxu0 %v1304
        %v1343 = vpop.f32.mrb[0].mxu0
        %v1344 = vadd.f32 0.0, %v1343
        %v1345 = vpop.f32.mrb[0].mxu0
        %v1346 = vpop.f32.mrb[0].mxu0
        %v1347 = vadd.f32 0.0, %v1346
        %v1348 = vpop.f32.mrb[0].mxu0
        %1349 = vmatprep.mubr.bf16.mxu0 0
        %1350 = vmatmul.mubr.bf16.gmra.mrb[0].mxu0 %v1307
        %v1351 = vpop.f32.mrb[0].mxu0
        %v1352 = vadd.f32 0.0, %v1351
        %v1353 = vpop.f32.mrb[0].mxu0
        %v1354 = vpop.f32.mrb[0].mxu0
        %v1355 = vadd.f32 0.0, %v1354
        %v1356 = vpop.f32.mrb[0].mxu0
        %1357 = vdwg.mxu0
        %v1358 = vadd.f32 %v1212, %v1344
        %v1359 = vadd.f32 %v1213, %v1347
        %v1360 = vadd.f32 %v1214, %v1352
        %v1361 = vadd.f32 %v1215, %v1355
        %1362 = vst [vmem:[%s338] sm:$0xff] %v1358
        %1363 = vst [vmem:[%s338 + $0x8] sm:$0xff] %v1359
        %1364 = vst [vmem:[%s338 + $0x10] sm:$0xff] %v1360
        %1365 = vst [vmem:[%s338 + $0x18] sm:$0xff] %v1361
        %v1366 = vadd.f32 %v1358, %v1359
        %v1367 = vadd.f32 %v1366, %v1360
        %v1368 = vadd.f32 %v1367, %v1361
        %v1369 = vrot.slane %v1368, 4
        %v1370 = vadd.f32 %v1368, %v1369
        %v1371 = vrot.slane %v1370, 2
        %v1372 = vadd.f32 %v1370, %v1371
        %v1373 = vrot.slane %v1372, 1
        %v1374 = vadd.f32 %v1372, %v1373
        %1375 = vst [vmem:[%s344] sm:$0x1] %v1374
        %v1376 = vmul.f32 %v1358, %v1358
        %v1377 = vmul.f32 %v1359, %v1359
        %v1378 = vmul.f32 %v1360, %v1360
        %v1379 = vmul.f32 %v1361, %v1361
        %v1380 = vadd.f32 %v1376, %v1377
        %v1381 = vadd.f32 %v1380, %v1378
        %v1382 = vadd.f32 %v1381, %v1379
        %v1383 = vrot.slane %v1382, 4
        %v1384 = vadd.f32 %v1382, %v1383
        %v1385 = vrot.slane %v1384, 2
        %v1386 = vadd.f32 %v1384, %v1385
        %v1387 = vrot.slane %v1386, 1
        %v1388 = vadd.f32 %v1386, %v1387
        %1389 = vst [vmem:[%s350] sm:$0x1] %v1388
        %s1390 = sand.u32 %s172, 1
        %s1391 = scalar_lea.sflag [#allocation3], %s1390
        %s1392 = sand.u32 %s172, 1
        %s1393 = smul.addr %s1392, 32
        %s1394 = scalar_lea.vmem [#allocation2], %s1393
        %s1395 = sand.u32 %s25, 1
        %s1396 = scalar_lea.sflag [#allocation5], %s1395
        %s1397 = sand.u32 %s200, 1
        %s1398 = scalar_lea.vmem [#allocation4], %s1397
        %s1399 = sand.u32 %s25, 1
        %s1400 = scalar_lea.sflag [#allocation5], %s1399
        %s1401 = sand.u32 %s228, 1
        %s1402 = scalar_lea.vmem [#allocation6], %s1401
        // Predicated region
        $region41: #{tpu_custom_call.1} parent=39 // pred_check
          %p1403 = pneg %p182
        $region42: #{tpu_custom_call.1} parent=39 // pred_check_branch
          %1405 = sbr.rel (%p1403) target = $region44
        $region43: #{tpu_custom_call.1} parent=39 // pred_region
          %s1406 = smul.u32 4, %s30
          %s1408 = ssub.s32 512, 512
          %1409 = vsyncadd %s1391, %s1408
          %s1410 = smul.addr %s29, 8
          %s1411 = sadd.s32 %s1406, %s1410
          %s1412 = smul.addr %s1411, 128
          %s1413 = scalar_lea.hbm %s5, %s1412
          %s1414 = sshll.u32 %s1394, 4
          %s1415 = int_to_ptr.vmem [resolvable:$true] %s1414
          %1420 = dma.vmem_to_hbm [thread:$0]  %s1415, 512, %s1413, %s1391, 128, 128, 8
        $region44: #{tpu_custom_call.1} parent=39 // pred_fallthru
          _
        // Predicated region
        $region45: #{tpu_custom_call.1} parent=39 // pred_check
          %p1421 = pneg %p210
        $region46: #{tpu_custom_call.1} parent=39 // pred_check_branch
          %1423 = sbr.rel (%p1421) target = $region48
        $region47: #{tpu_custom_call.1} parent=39 // pred_region
          %s1425 = ssub.s32 16, 16
          %1426 = vsyncadd %s1396, %s1425
          %s1427 = smul.addr %s29, 2
          %s1428 = sadd.s32 %s30, %s1427
          %s1429 = smul.addr %s1428, 16
          %s1430 = scalar_lea.hbm %s6, %s1429
          %s1432 = sshll.u32 %s1398, 4
          %s1433 = int_to_ptr.vmem [resolvable:$true] %s1432
          %1435 = dma.vmem_to_hbm [thread:$0]  %s1433, 16, %s1430, %s1396
        $region48: #{tpu_custom_call.1} parent=39 // pred_fallthru
          _
        // Predicated region
        $region49: #{tpu_custom_call.1} parent=39 // pred_check
          %p1436 = pneg %p238
        $region50: #{tpu_custom_call.1} parent=39 // pred_check_branch
          %1438 = sbr.rel (%p1436) target = $region52
        $region51: #{tpu_custom_call.1} parent=39 // pred_region
          %s1440 = ssub.s32 16, 16
          %1441 = vsyncadd %s1400, %s1440
          %s1442 = smul.addr %s29, 2
          %s1443 = sadd.s32 %s30, %s1442
          %s1444 = smul.addr %s1443, 16
          %s1445 = scalar_lea.hbm %s7, %s1444
          %s1447 = sshll.u32 %s1402, 4
          %s1448 = int_to_ptr.vmem [resolvable:$true] %s1447
          %1450 = dma.vmem_to_hbm [thread:$0]  %s1448, 16, %s1445, %s1400
        $region52: #{tpu_custom_call.1} parent=39 // pred_fallthru
          _
      $region40: #{tpu_custom_call.1} parent=5 // pred_fallthru
        _
      %p1451 = scmp.le.s32.totalorder 2, %s20
      // Predicated region
      $region53: #{tpu_custom_call.1} parent=5 // pred_check
        %p1452 = pneg %p1451
      $region54: #{tpu_custom_call.1} parent=5 // pred_check_branch
        %1454 = sbr.rel (%p1452) target = $region56
      $region55: #{tpu_custom_call.1} parent=5 // pred_region
        %s1455 = ssub.s32 %s20, 2
        // Predicated region
        $region57: #{tpu_custom_call.1} parent=55 // pred_check
          %p1456 = pneg %p188
        $region58: #{tpu_custom_call.1} parent=55 // pred_check_branch
          %1458 = sbr.rel (%p1456) target = $region60
        $region59: #{tpu_custom_call.1} parent=55 // pred_region
          %s1459 = sand.u32 %s173, 1
          %s1460 = scalar_lea.sflag [#allocation3], %s1459
          %s1461 = sand.u32 %s173, 1
          %s1462 = smul.addr %s1461, 32
          %s1463 = scalar_lea.vmem [#allocation2], %s1462
          %1464 = dma.done %s1460, 512
        $region60: #{tpu_custom_call.1} parent=55 // pred_fallthru
          _
        // Predicated region
        $region61: #{tpu_custom_call.1} parent=55 // pred_check
          %p1465 = pneg %p216
        $region62: #{tpu_custom_call.1} parent=55 // pred_check_branch
          %1467 = sbr.rel (%p1465) target = $region64
        $region63: #{tpu_custom_call.1} parent=55 // pred_region
          %s1468 = sand.u32 %s26, 1
          %s1469 = scalar_lea.sflag [#allocation5], %s1468
          %s1470 = sand.u32 %s201, 1
          %s1471 = scalar_lea.vmem [#allocation4], %s1470
          %1472 = dma.done %s1469, 16
        $region64: #{tpu_custom_call.1} parent=55 // pred_fallthru
          _
        // Predicated region
        $region65: #{tpu_custom_call.1} parent=55 // pred_check
          %p1473 = pneg %p244
        $region66: #{tpu_custom_call.1} parent=55 // pred_check_branch
          %1475 = sbr.rel (%p1473) target = $region68
        $region67: #{tpu_custom_call.1} parent=55 // pred_region
          %s1476 = sand.u32 %s26, 1
          %s1477 = scalar_lea.sflag [#allocation5], %s1476
          %s1478 = sand.u32 %s229, 1
          %s1479 = scalar_lea.vmem [#allocation6], %s1478
          %1480 = dma.done %s1477, 16
        $region68: #{tpu_custom_call.1} parent=55 // pred_fallthru
          _
      $region56: #{tpu_custom_call.1} parent=5 // pred_fallthru
        _
    $region6: #{tpu_custom_call.1} parent=1 // loop_footer
      %s24 = sadd.s32 1, %s20
    $region7: #{tpu_custom_call.1} parent=1 // loop_footer_branch
      %19 = sbr.rel target = $region3
    $region8: #{tpu_custom_call.1} parent=1 // loop_exit
      _
    %1481 = vsyncpa [#allocation3], 1
    %s1482 = scalar_lea.sflag [#allocation3], 1
    %1483 = vsyncpa %s1482, 1
    %1484 = vsyncpa [#allocation5], 1
    %s1485 = scalar_lea.sflag [#allocation5], 1
    %1486 = vsyncpa %s1485, 1

</llo_original>
